<compile_context>
chip_gen: v7x
topology: tpu7x:2x2x1
jax: 0.10.0
libtpu: 0.0.40
codegen_flags: <defaults>
</compile_context>

<pallas_src>
import functools

import jax
import jax.numpy as jnp
from jax.experimental import pallas as pl
from jax.experimental.pallas import tpu as pltpu

MAT_DIFF_LOSS_SCALE = 0.001


def _get_loss_kernel(pred_ref, target_ref, trans_ref, out_ref, acc_ref, *,
                     total_b, block_b, mat_diff_scale):
    pid = pl.program_id(0)
    last = pl.num_programs(0) - 1

    @pl.when(pid == 0)
    def _init():
        acc_ref[0] = 0.0   # sum_b pred[b, target[b]]
        acc_ref[1] = 0.0   # sum_b ||T_b T_b^T - I||_F

    pred = pred_ref[...]                         # (TB, C) f32 log-probs
    tgt = target_ref[...]                        # (TB, 1) i32
    trans_lo = trans_ref[...]                    # (TB, D, D) bf16
    tb, c = pred.shape
    d = trans_lo.shape[-1]

    # ---- NLL partial: pick pred[b, target[b]] via a one-hot select ----
    class_ids = jax.lax.broadcasted_iota(jnp.int32, (tb, c), 1)
    hit = class_ids == tgt                       # (TB, C) bool

    # ---- regularizer partial: ||T T^T - I||_F per row, no eye/diff temps ----
    # ||T T^T - I||_F^2 = ||T T^T||_F^2 - 2*||T||_F^2 + D
    gram = jnp.einsum('bij,bkj->bik', trans_lo, trans_lo,
                      preferred_element_type=jnp.float32)          # (TB, D, D)
    trans_f32 = trans_lo.astype(jnp.float32)
    g2 = (jnp.sum(gram * gram, axis=2)
          - 2.0 * jnp.sum(trans_f32 * trans_f32, axis=2))          # (TB, D)
    per_b = jnp.sum(g2, axis=1, keepdims=True) + float(d)          # (TB, 1)
    fro = jnp.sqrt(jnp.maximum(per_b, 0.0))                        # (TB, 1)

    if total_b % block_b == 0:
        # All rows valid (static): no masking needed.
        picked = jnp.where(hit, pred, 0.0)
        fro_masked = fro
    else:
        # Mask out-of-bounds rows of the (possibly partial) last tile with
        # selects (robust to garbage/NaN in the padded OOB region).
        row = jax.lax.broadcasted_iota(jnp.int32, (tb, 1), 0) + pid * block_b
        valid = row < total_b                                      # (TB, 1)
        picked = jnp.where(jnp.logical_and(hit, valid), pred, 0.0)
        fro_masked = jnp.where(valid, fro, 0.0)

    acc_ref[0] += jnp.sum(picked)        # scalar partial (picked log-probs)
    acc_ref[1] += jnp.sum(fro_masked)    # scalar partial (Frobenius norms)

    @pl.when(pid == last)
    def _finalize():
        # 1/B and the regularizer scale folded into compile-time constants.
        out_ref[0, 0] = (acc_ref[0] * (-1.0 / total_b)
                         + acc_ref[1] * (mat_diff_scale / total_b))


def get_loss(pred, target, trans_feat, *,
             mat_diff_loss_scale=MAT_DIFF_LOSS_SCALE,
             block_b=None, matmul_dtype=jnp.bfloat16):
    """pred: (B, C) f32 log-probs; target: (B,) int; trans_feat: (B, D, D) f32."""
    B, C = pred.shape
    D = trans_feat.shape[-1]

    # Batch tile: full batch when small, else 128 rows (multiple of 8; the
    # double-buffered (TB,D,D) tiles stay far under the v7x 64 MiB VMEM).
    if block_b is None:
        block_b = B if B <= 128 else 128
    grid = (pl.cdiv(B, block_b),)

    pred_f32 = pred.astype(jnp.float32)
    target_2d = target.astype(jnp.int32).reshape(B, 1)
    trans_lo = trans_feat.astype(matmul_dtype)   # bf16: half DMA, MXU-native

    kernel = functools.partial(
        _get_loss_kernel,
        total_b=B, block_b=block_b, mat_diff_scale=float(mat_diff_loss_scale))

    cost = pl.CostEstimate(
        flops=2 * B * D * D * D + 6 * B * D * D + 2 * B * C,
        transcendentals=B,
        bytes_accessed=(pred_f32.size * 4 + target_2d.size * 4
                        + trans_lo.size * trans_lo.dtype.itemsize + 4),
    )

    out = pl.pallas_call(
        kernel,
        out_shape=jax.ShapeDtypeStruct((1, 1), jnp.float32),
        grid_spec=pltpu.PrefetchScalarGridSpec(
            num_scalar_prefetch=0,
            grid=grid,
            in_specs=[
                pl.BlockSpec((block_b, C), lambda i: (i, 0)),
                pl.BlockSpec((block_b, 1), lambda i: (i, 0)),
                pl.BlockSpec((block_b, D, D), lambda i: (i, 0, 0)),
            ],
            out_specs=pl.BlockSpec(memory_space=pltpu.SMEM),
            scratch_shapes=[pltpu.SMEM((2,), jnp.float32)],
        ),
        compiler_params=pltpu.CompilerParams(
            # Accumulation across the batch-tile axis -> "arbitrary".
            dimension_semantics=("arbitrary",)),
        cost_estimate=cost,
    )(pred_f32, target_2d, trans_lo)
    return out[0, 0]


def _reference(pred, target, trans_feat):
    # Pure-JAX fp32 reference mirroring the PyTorch forward.
    B = pred.shape[0]
    nll = -jnp.mean(pred[jnp.arange(B), target])
    D = trans_feat.shape[1]
    I = jnp.eye(D, dtype=jnp.float32)[None]
    diff = jnp.einsum('bij,bkj->bik', trans_feat, trans_feat) - I
    mat_diff = jnp.mean(jnp.sqrt(jnp.sum(diff * diff, axis=(1, 2))))
    return nll + mat_diff * MAT_DIFF_LOSS_SCALE


if __name__ == "__main__":
    key = jax.random.PRNGKey(0)
    k1, k2, k3 = jax.random.split(key, 3)

    B, C, D = 8, 16, 64  # batch, num_classes, feature-transform dim

    logits = jax.random.normal(k1, (B, C), dtype=jnp.float32)
    pred = jax.nn.log_softmax(logits, axis=-1)                 # NLLLoss expects log-probs
    target = jax.random.randint(k2, (B,), 0, C, dtype=jnp.int32)
    trans_feat = jax.random.normal(k3, (B, D, D), dtype=jnp.float32) * 0.1

    out = jax.block_until_ready(get_loss(pred, target, trans_feat))
    ref = jax.block_until_ready(_reference(pred, target, trans_feat))

    # bf16 gram inputs introduce ~1e-6-level error on the 1e-3-scaled
    # regularizer term; tolerance loosened accordingly.
    assert jnp.allclose(out, ref, rtol=1e-4, atol=1e-4), (out, ref)
    print("KERNEL_OK")
</pallas_src>

<mosaic_0001>
module attributes {stable_mosaic.version = 11 : i64} {
  func.func @_get_loss_kernel(%arg0: i32, %arg1: memref<8x16xf32, #tpu.memory_space<vmem>>, %arg2: memref<8x1xi32, #tpu.memory_space<vmem>>, %arg3: memref<8x64x64xbf16, #tpu.memory_space<vmem>>, %arg4: memref<1x1xf32, #tpu.memory_space<smem>>, %arg5: memref<2xf32, #tpu.memory_space<smem>>) attributes {dimension_semantics = [#tpu.dimension_semantics<arbitrary>], iteration_bounds = array<i64: 1>, scalar_prefetch = 0 : i64, scratch_operands = 1 : i64, tpu.core_type = #tpu.core_type<tc>, window_params = [{transform_indices = @transform_0, window_bounds = array<i64: 8, 16>}, {transform_indices = @transform_1, window_bounds = array<i64: 8, 1>}, {transform_indices = @transform_2, window_bounds = array<i64: 8, 64, 64>}, {transform_indices = @transform_3, window_bounds = array<i64: 1, 1>}]} {
    %c0_i32 = arith.constant 0 : i32
    %0 = arith.cmpi eq, %arg0, %c0_i32 : i32
    %1 = arith.extui %0 : i1 to i32
    %c0_i32_0 = arith.constant 0 : i32
    %2 = arith.cmpi ne, %1, %c0_i32_0 : i32
    scf.if %2 {
      %cst_21 = arith.constant 0.000000e+00 : f32
      %c0_22 = arith.constant 0 : index
      %44 = memref.load %arg5[%c0_22] : memref<2xf32, #tpu.memory_space<smem>>
      memref.store %cst_21, %arg5[%c0_22] : memref<2xf32, #tpu.memory_space<smem>>
      %cst_23 = arith.constant 0.000000e+00 : f32
      %c1_24 = arith.constant 1 : index
      %45 = memref.load %arg5[%c1_24] : memref<2xf32, #tpu.memory_space<smem>>
      memref.store %cst_23, %arg5[%c1_24] : memref<2xf32, #tpu.memory_space<smem>>
    } else {
    }
    %c0 = arith.constant 0 : index
    %c0_1 = arith.constant 0 : index
    %3 = vector.load %arg1[%c0, %c0_1] : memref<8x16xf32, #tpu.memory_space<vmem>>, vector<8x16xf32>
    %c0_2 = arith.constant 0 : index
    %c0_3 = arith.constant 0 : index
    %4 = vector.load %arg2[%c0_2, %c0_3] : memref<8x1xi32, #tpu.memory_space<vmem>>, vector<8x1xi32>
    %c0_4 = arith.constant 0 : index
    %c0_5 = arith.constant 0 : index
    %c0_6 = arith.constant 0 : index
    %5 = vector.load %arg3[%c0_4, %c0_5, %c0_6] : memref<8x64x64xbf16, #tpu.memory_space<vmem>>, vector<8x64x64xbf16>
    %6 = tpu.iota {dimensions = array<i32: 1>} : vector<8x16xi32>
    %7 = vector.broadcast %4 : vector<8x1xi32> to vector<8x16xi32>
    %8 = arith.cmpi eq, %6, %7 : vector<8x16xi32>
    "tpu.trace_start"() <{level = 10 : i32, message = "bij,bkj->bik"}> : () -> ()
    %cst = arith.constant dense<0.000000e+00> : vector<8x64x64xf32>
    %9 = tpu.matmul %5, %5, %cst {dimension_numbers = #tpu.dot_dimension_numbers<[2], [2], [1], [1], [0, 0, 0, 1, 1, 1], [0], [0]>} : vector<8x64x64xbf16>, vector<8x64x64xbf16>, vector<8x64x64xf32> -> vector<8x64x64xf32>
    "tpu.trace_stop"() : () -> ()
    %10 = arith.extf %5 : vector<8x64x64xbf16> to vector<8x64x64xf32>
    %11 = arith.mulf %9, %9 : vector<8x64x64xf32>
    %cst_7 = arith.constant dense<0.000000e+00> : vector<8x64xf32>
    %12 = vector.multi_reduction <add>, %11, %cst_7 [2] : vector<8x64x64xf32> to vector<8x64xf32>
    %13 = arith.mulf %10, %10 : vector<8x64x64xf32>
    %cst_8 = arith.constant dense<0.000000e+00> : vector<8x64xf32>
    %14 = vector.multi_reduction <add>, %13, %cst_8 [2] : vector<8x64x64xf32> to vector<8x64xf32>
    %cst_9 = arith.constant 2.000000e+00 : f32
    %15 = vector.broadcast %cst_9 : f32 to vector<8x64xf32>
    %16 = arith.mulf %15, %14 : vector<8x64xf32>
    %17 = arith.subf %12, %16 : vector<8x64xf32>
    %cst_10 = arith.constant dense<0.000000e+00> : vector<8xf32>
    %18 = vector.multi_reduction <add>, %17, %cst_10 [1] : vector<8x64xf32> to vector<8xf32>
    %19 = vector.shape_cast %18 : vector<8xf32> to vector<8x1xf32>
    %cst_11 = arith.constant 6.400000e+01 : f32
    %20 = vector.broadcast %cst_11 : f32 to vector<8x1xf32>
    %21 = arith.addf %19, %20 : vector<8x1xf32>
    %cst_12 = arith.constant 0.000000e+00 : f32
    %22 = vector.broadcast %cst_12 : f32 to vector<8x1xf32>
    %23 = arith.maximumf %21, %22 : vector<8x1xf32>
    %24 = math.sqrt %23 : vector<8x1xf32>
    %cst_13 = arith.constant 0.000000e+00 : f32
    %25 = vector.broadcast %cst_13 : f32 to vector<8x16xf32>
    %26 = arith.select %8, %3, %25 : vector<8x16xi1>, vector<8x16xf32>
    %c0_14 = arith.constant 0 : index
    %27 = memref.load %arg5[%c0_14] : memref<2xf32, #tpu.memory_space<smem>>
    %28 = vector.shape_cast %26 : vector<8x16xf32> to vector<1x8x16xf32>
    %cst_15 = arith.constant dense<0.000000e+00> : vector<1xf32>
    %29 = vector.multi_reduction <add>, %28, %cst_15 [1, 2] : vector<1x8x16xf32> to vector<1xf32>
    %30 = vector.shape_cast %29 : vector<1xf32> to vector<1x1x1xf32>
    %31 = vector.extract %30[0, 0, 0] : f32 from vector<1x1x1xf32>
    %32 = arith.addf %27, %31 : f32
    %c0_16 = arith.constant 0 : index
    %33 = memref.load %arg5[%c0_16] : memref<2xf32, #tpu.memory_space<smem>>
    memref.store %32, %arg5[%c0_16] : memref<2xf32, #tpu.memory_space<smem>>
    %c1 = arith.constant 1 : index
    %34 = memref.load %arg5[%c1] : memref<2xf32, #tpu.memory_space<smem>>
    %35 = vector.shape_cast %24 : vector<8x1xf32> to vector<1x8x1xf32>
    %cst_17 = arith.constant dense<0.000000e+00> : vector<1xf32>
    %36 = vector.multi_reduction <add>, %35, %cst_17 [1, 2] : vector<1x8x1xf32> to vector<1xf32>
    %37 = vector.shape_cast %36 : vector<1xf32> to vector<1x1x1xf32>
    %38 = vector.extract %37[0, 0, 0] : f32 from vector<1x1x1xf32>
    %39 = arith.addf %34, %38 : f32
    %c1_18 = arith.constant 1 : index
    %40 = memref.load %arg5[%c1_18] : memref<2xf32, #tpu.memory_space<smem>>
    memref.store %39, %arg5[%c1_18] : memref<2xf32, #tpu.memory_space<smem>>
    %c0_i32_19 = arith.constant 0 : i32
    %41 = arith.cmpi eq, %arg0, %c0_i32_19 : i32
    %42 = arith.extui %41 : i1 to i32
    %c0_i32_20 = arith.constant 0 : i32
    %43 = arith.cmpi ne, %42, %c0_i32_20 : i32
    scf.if %43 {
      %c0_21 = arith.constant 0 : index
      %44 = memref.load %arg5[%c0_21] : memref<2xf32, #tpu.memory_space<smem>>
      %cst_22 = arith.constant -1.250000e-01 : f32
      %45 = arith.mulf %44, %cst_22 : f32
      %c1_23 = arith.constant 1 : index
      %46 = memref.load %arg5[%c1_23] : memref<2xf32, #tpu.memory_space<smem>>
      %cst_24 = arith.constant 1.250000e-04 : f32
      %47 = arith.mulf %46, %cst_24 : f32
      %48 = arith.addf %45, %47 : f32
      %c0_25 = arith.constant 0 : index
      %c0_26 = arith.constant 0 : index
      %49 = memref.load %arg4[%c0_25, %c0_26] : memref<1x1xf32, #tpu.memory_space<smem>>
      memref.store %48, %arg4[%c0_25, %c0_26] : memref<1x1xf32, #tpu.memory_space<smem>>
    } else {
    }
    return
  }
  func.func @transform_0(%arg0: i32) -> (i32, i32) {
    %c0_i32 = arith.constant 0 : i32
    %c0_i32_0 = arith.constant 0 : i32
    return %arg0, %c0_i32 : i32, i32
  }
  func.func @transform_1(%arg0: i32) -> (i32, i32) {
    %c0_i32 = arith.constant 0 : i32
    %c0_i32_0 = arith.constant 0 : i32
    return %arg0, %c0_i32 : i32, i32
  }
  func.func @transform_2(%arg0: i32) -> (i32, i32, i32) {
    %c0_i32 = arith.constant 0 : i32
    %c0_i32_0 = arith.constant 0 : i32
    %c0_i32_1 = arith.constant 0 : i32
    return %arg0, %c0_i32, %c0_i32_0 : i32, i32, i32
  }
  func.func @transform_3(%arg0: i32) -> (i32, i32) {
    %c0_i32 = arith.constant 0 : i32
    %c0_i32_0 = arith.constant 0 : i32
    %c0_i32_1 = arith.constant 0 : i32
    return %c0_i32, %c0_i32_0 : i32, i32
  }
}

</mosaic_0001>

<llo_original>
// kernel: tpu_custom_call.1
$region0: #{tpu_custom_call.1}
  #allocation0 [shape = 'u32[]', space=smem, size = 0x4, offset = 0x4, fixed_abs, tag = 'smem constant byte address 0x4 - core index']
  #allocation1 [shape = 'u32[144,128]{1,0:T(1,128)}', space=vmem, size = 0x12000, scoped, tag = 'internal scratch']
  #allocation2 [shape = 'f32[2]{0:T(128)}', space=smem, size = 0x200, scoped, tag = 'scratch operand']
  %s0 = inlined_call_operand.vmem [shape: f32[8,16], index: 0, kind: input, shape index: {}]
  %s1 = inlined_call_operand.vmem [shape: s32[8,1], index: 1, kind: input, shape index: {}]
  %s2 = inlined_call_operand.hbm [shape: bf16[8,64,64], index: 2, kind: input, shape index: {}]
  %s3 = inlined_call_operand.hbm [shape: f32[1,1], index: 3, kind: output, shape index: {}]
  %s4 = sld [smem:[#allocation0]]
  $region34: #{tpu_custom_call.1} parent=0
    _
  %s6 = ssub.s32 1, %s4
  %s7 = scalar_select 0, %s6, %s4
  $region1: #{tpu_custom_call.1} parent=0
    #allocation3 [shape = 'u8[131072]{0}', space=vmem, size = 0x20000, scoped, tag = 'input window, operand 2, single buffered']
    #allocation4 [shape = 's32[1]{0}', space=sflag, size = 0x4, scoped, tag = 'scoped memory for tpu_custom_call.1']
    #allocation5 [shape = 's32[1]{0}', space=sflag, size = 0x4, scoped, tag = 'scoped memory for tpu_custom_call.1']
    #allocation6 [shape = 'u8[512]{0}', space=smem, size = 0x200, scoped, tag = 'output window, operand 0, single buffered']
    %8 = vsyncpa [#allocation4], 0
    %9 = vsyncpa [#allocation5], 0
    // Predicated region
    $region2: #{tpu_custom_call.1} parent=1 // pred_check
      _
    $region3: #{tpu_custom_call.1} parent=1 // pred_check_branch
      %11 = sbr.rel (0) target = $region5
    $region4: #{tpu_custom_call.1} parent=1 // pred_region
      _
    $region5: #{tpu_custom_call.1} parent=1 // pred_fallthru
      _
    // Predicated region
    $region6: #{tpu_custom_call.1} parent=1 // pred_check
      _
    $region7: #{tpu_custom_call.1} parent=1 // pred_check_branch
      %13 = sbr.rel (0) target = $region9
    $region8: #{tpu_custom_call.1} parent=1 // pred_region
      _
    $region9: #{tpu_custom_call.1} parent=1 // pred_fallthru
      _
    // Predicated region
    $region10: #{tpu_custom_call.1} parent=1 // pred_check
      _
    $region11: #{tpu_custom_call.1} parent=1 // pred_check_branch
      %15 = sbr.rel (0) target = $region13
    $region12: #{tpu_custom_call.1} parent=1 // pred_region
      %s17 = ssub.s32 4096, 4096
      %18 = vsyncadd [#allocation4], %s17
      %s19 = sshll.u32 [#allocation3], 4
      %s20 = int_to_ptr.vmem [resolvable:$true] %s19
      %25 = dma.hbm_to_vmem [thread:$0]  %s2, 4096, %s20, [#allocation4], 64, 64, 4
    $region13: #{tpu_custom_call.1} parent=1 // pred_fallthru
      _
    // Predicated region
    $region14: #{tpu_custom_call.1} parent=1 // pred_check
      _
    $region15: #{tpu_custom_call.1} parent=1 // pred_check_branch
      %27 = sbr.rel (0) target = $region17
    $region16: #{tpu_custom_call.1} parent=1 // pred_region
      %28 = dma.done [#allocation4], 4096
    $region17: #{tpu_custom_call.1} parent=1 // pred_fallthru
      _
    %p30 = scmp.eq.s32.totalorder 0, 0
    // Predicated region
    $region18: #{tpu_custom_call.1} parent=1 // pred_check
      %p31 = pneg %p30
    $region19: #{tpu_custom_call.1} parent=1 // pred_check_branch
      %33 = sbr.rel (%p31) target = $region21
    $region20: #{tpu_custom_call.1} parent=1 // pred_region
      %s34 = scalar_lea.smem [#allocation2], 0
      %35 = sst [smem:[%s34]] 0.0
      %s36 = scalar_lea.smem [#allocation2], 1
      %37 = sst [smem:[%s36]] 0.0
    $region21: #{tpu_custom_call.1} parent=1 // pred_fallthru
      _
    %v38 = vld [vmem:[%s0] sm:$0xff]
    %v39 = vld [vmem:[%s1] sm:$0xff]
    %v40 = vld [vmem:[#allocation3] sm:$0xf]
    %v41 = vld [vmem:[#allocation3 + $0x4] sm:$0xf]
    %v42 = vld [vmem:[#allocation3 + $0x8] sm:$0xf]
    %v43 = vld [vmem:[#allocation3 + $0xc] sm:$0xf]
    %v44 = vld [vmem:[#allocation3 + $0x10] sm:$0xf]
    %v45 = vld [vmem:[#allocation3 + $0x14] sm:$0xf]
    %v46 = vld [vmem:[#allocation3 + $0x18] sm:$0xf]
    %v47 = vld [vmem:[#allocation3 + $0x1c] sm:$0xf]
    %v48 = vld [vmem:[#allocation3 + $0x20] sm:$0xf]
    %v49 = vld [vmem:[#allocation3 + $0x24] sm:$0xf]
    %v50 = vld [vmem:[#allocation3 + $0x28] sm:$0xf]
    %v51 = vld [vmem:[#allocation3 + $0x2c] sm:$0xf]
    %v52 = vld [vmem:[#allocation3 + $0x30] sm:$0xf]
    %v53 = vld [vmem:[#allocation3 + $0x34] sm:$0xf]
    %v54 = vld [vmem:[#allocation3 + $0x38] sm:$0xf]
    %v55 = vld [vmem:[#allocation3 + $0x3c] sm:$0xf]
    %v56 = vld [vmem:[#allocation3 + $0x40] sm:$0xf]
    %v57 = vld [vmem:[#allocation3 + $0x44] sm:$0xf]
    %v58 = vld [vmem:[#allocation3 + $0x48] sm:$0xf]
    %v59 = vld [vmem:[#allocation3 + $0x4c] sm:$0xf]
    %v60 = vld [vmem:[#allocation3 + $0x50] sm:$0xf]
    %v61 = vld [vmem:[#allocation3 + $0x54] sm:$0xf]
    %v62 = vld [vmem:[#allocation3 + $0x58] sm:$0xf]
    %v63 = vld [vmem:[#allocation3 + $0x5c] sm:$0xf]
    %v64 = vld [vmem:[#allocation3 + $0x60] sm:$0xf]
    %v65 = vld [vmem:[#allocation3 + $0x64] sm:$0xf]
    %v66 = vld [vmem:[#allocation3 + $0x68] sm:$0xf]
    %v67 = vld [vmem:[#allocation3 + $0x6c] sm:$0xf]
    %v68 = vld [vmem:[#allocation3 + $0x70] sm:$0xf]
    %v69 = vld [vmem:[#allocation3 + $0x74] sm:$0xf]
    %v70 = vld [vmem:[#allocation3 + $0x78] sm:$0xf]
    %v71 = vld [vmem:[#allocation3 + $0x7c] sm:$0xf]
    %v72 = vld [vmem:[#allocation3 + $0x80] sm:$0xf]
    %v73 = vld [vmem:[#allocation3 + $0x84] sm:$0xf]
    %v74 = vld [vmem:[#allocation3 + $0x88] sm:$0xf]
    %v75 = vld [vmem:[#allocation3 + $0x8c] sm:$0xf]
    %v76 = vld [vmem:[#allocation3 + $0x90] sm:$0xf]
    %v77 = vld [vmem:[#allocation3 + $0x94] sm:$0xf]
    %v78 = vld [vmem:[#allocation3 + $0x98] sm:$0xf]
    %v79 = vld [vmem:[#allocation3 + $0x9c] sm:$0xf]
    %v80 = vld [vmem:[#allocation3 + $0xa0] sm:$0xf]
    %v81 = vld [vmem:[#allocation3 + $0xa4] sm:$0xf]
    %v82 = vld [vmem:[#allocation3 + $0xa8] sm:$0xf]
    %v83 = vld [vmem:[#allocation3 + $0xac] sm:$0xf]
    %v84 = vld [vmem:[#allocation3 + $0xb0] sm:$0xf]
    %v85 = vld [vmem:[#allocation3 + $0xb4] sm:$0xf]
    %v86 = vld [vmem:[#allocation3 + $0xb8] sm:$0xf]
    %v87 = vld [vmem:[#allocation3 + $0xbc] sm:$0xf]
    %v88 = vld [vmem:[#allocation3 + $0xc0] sm:$0xf]
    %v89 = vld [vmem:[#allocation3 + $0xc4] sm:$0xf]
    %v90 = vld [vmem:[#allocation3 + $0xc8] sm:$0xf]
    %v91 = vld [vmem:[#allocation3 + $0xcc] sm:$0xf]
    %v92 = vld [vmem:[#allocation3 + $0xd0] sm:$0xf]
    %v93 = vld [vmem:[#allocation3 + $0xd4] sm:$0xf]
    %v94 = vld [vmem:[#allocation3 + $0xd8] sm:$0xf]
    %v95 = vld [vmem:[#allocation3 + $0xdc] sm:$0xf]
    %v96 = vld [vmem:[#allocation3 + $0xe0] sm:$0xf]
    %v97 = vld [vmem:[#allocation3 + $0xe4] sm:$0xf]
    %v98 = vld [vmem:[#allocation3 + $0xe8] sm:$0xf]
    %v99 = vld [vmem:[#allocation3 + $0xec] sm:$0xf]
    %v100 = vld [vmem:[#allocation3 + $0xf0] sm:$0xf]
    %v101 = vld [vmem:[#allocation3 + $0xf4] sm:$0xf]
    %v102 = vld [vmem:[#allocation3 + $0xf8] sm:$0xf]
    %v103 = vld [vmem:[#allocation3 + $0xfc] sm:$0xf]
    %v104 = vlaneseq
    %v105 = vand.u32 %v104, 127
    %106 = vset.pattern.permute.xlu0 0
    %107 = vperm.xlu0 %106, %v39
    %v108 = vpop.permute.xlu0 %107
    %vm109 = vcmp.eq.s32.totalorder %v105, %v108
    %v118 = vunpack.c.l.b16 %v40
    %v119 = vunpack.c.l.b16 %v41
    %v120 = vunpack.c.l.b16 %v42
    %v121 = vunpack.c.l.b16 %v43
    %v122 = vunpack.c.l.b16 %v44
    %v123 = vunpack.c.l.b16 %v45
    %v124 = vunpack.c.l.b16 %v46
    %v125 = vunpack.c.l.b16 %v47
    %v126 = vpack.c.b16 %v119, %v118
    %v127 = vpack.c.b16 %v121, %v120
    %v128 = vpack.c.b16 %v123, %v122
    %v129 = vpack.c.b16 %v125, %v124
    %vm130 = vcmask 523264
    %v132 = vsel %vm130, %v126, 0
    %v135 = vsel %vm130, %v127, 0
    %v138 = vsel %vm130, %v128, 0
    %v141 = vsel %vm130, %v129, 0
    %143 = vmatprep.subr.bf16.mxu0 0
    %144 = vmatpush1.bf16.xpose.msra.mxu0 %v132
    %145 = vmatprep.subr.bf16.mxu0 0
    %146 = vmatpush1.bf16.xpose.msra.mxu0 %v135
    %147 = vmatprep.subr.bf16.mxu0 0
    %148 = vmatpush1.bf16.xpose.msra.mxu0 %v138
    %149 = vmatprep.subr.bf16.mxu0 0
    %150 = vmatpush1.bf16.xpose.msra.mxu0 %v141
    %151 = vmatprep.subr.bf16.mxu0 0
    %152 = vmatpush1.bf16.xpose.msra.mxu0 0
    %153 = vmatprep.subr.bf16.mxu0 0
    %154 = vmatpush1.bf16.xpose.msra.mxu0 0
    %155 = vmatprep.subr.bf16.mxu0 0
    %156 = vmatpush1.bf16.xpose.msra.mxu0 0
    %157 = vmatprep.subr.bf16.mxu0 0
    %158 = vmatpush1.bf16.xpose.msra.mxu0 0
    %159 = vmatprep.subr.bf16.mxu0 0
    %160 = vmatpush1.bf16.xpose.msra.mxu0 0
    %161 = vmatprep.subr.bf16.mxu0 0
    %162 = vmatpush1.bf16.xpose.msra.mxu0 0
    %163 = vmatprep.subr.bf16.mxu0 0
    %164 = vmatpush1.bf16.xpose.msra.mxu0 0
    %165 = vmatprep.subr.bf16.mxu0 0
    %166 = vmatpush1.bf16.xpose.msra.mxu0 0
    %167 = vmatprep.subr.bf16.mxu0 0
    %168 = vmatpush1.bf16.xpose.msra.mxu0 0
    %169 = vmatprep.subr.bf16.mxu0 0
    %170 = vmatpush1.bf16.xpose.msra.mxu0 0
    %171 = vmatprep.subr.bf16.mxu0 0
    %172 = vmatpush1.bf16.xpose.msra.mxu0 0
    %173 = vmatprep.subr.bf16.mxu0 0
    %174 = vmatpush1.bf16.xpose.msra.mxu0 0
    %175 = vmatprep.mubr.bf16.mxu0 0
    %176 = vmatmul.mubr.bf16.gmra.mrb[0].mxu0 %v132
    %v177 = vpop.f32.mrb[0].mxu0
    %v178 = vadd.f32 0.0, %v177
    %v179 = vpop.f32.mrb[0].mxu0
    %v180 = vpop.f32.mrb[0].mxu0
    %v181 = vadd.f32 0.0, %v180
    %v182 = vpop.f32.mrb[0].mxu0
    %183 = vmatprep.mubr.bf16.mxu0 0
    %184 = vmatmul.mubr.bf16.gmra.mrb[0].mxu0 %v135
    %v185 = vpop.f32.mrb[0].mxu0
    %v186 = vadd.f32 0.0, %v185
    %v187 = vpop.f32.mrb[0].mxu0
    %v188 = vpop.f32.mrb[0].mxu0
    %v189 = vadd.f32 0.0, %v188
    %v190 = vpop.f32.mrb[0].mxu0
    %191 = vmatprep.mubr.bf16.mxu0 0
    %192 = vmatmul.mubr.bf16.gmra.mrb[0].mxu0 %v138
    %v193 = vpop.f32.mrb[0].mxu0
    %v194 = vadd.f32 0.0, %v193
    %v195 = vpop.f32.mrb[0].mxu0
    %v196 = vpop.f32.mrb[0].mxu0
    %v197 = vadd.f32 0.0, %v196
    %v198 = vpop.f32.mrb[0].mxu0
    %199 = vmatprep.mubr.bf16.mxu0 0
    %200 = vmatmul.mubr.bf16.gmra.mrb[0].mxu0 %v141
    %v201 = vpop.f32.mrb[0].mxu0
    %v202 = vadd.f32 0.0, %v201
    %v203 = vpop.f32.mrb[0].mxu0
    %v204 = vpop.f32.mrb[0].mxu0
    %v205 = vadd.f32 0.0, %v204
    %v206 = vpop.f32.mrb[0].mxu0
    %207 = vdwg.mxu0
    %v216 = vunpack.c.l.b16 %v48
    %v217 = vunpack.c.l.b16 %v49
    %v218 = vunpack.c.l.b16 %v50
    %v219 = vunpack.c.l.b16 %v51
    %v220 = vunpack.c.l.b16 %v52
    %v221 = vunpack.c.l.b16 %v53
    %v222 = vunpack.c.l.b16 %v54
    %v223 = vunpack.c.l.b16 %v55
    %v224 = vpack.c.b16 %v217, %v216
    %v225 = vpack.c.b16 %v219, %v218
    %v226 = vpack.c.b16 %v221, %v220
    %v227 = vpack.c.b16 %v223, %v222
    %v229 = vsel %vm130, %v224, 0
    %v232 = vsel %vm130, %v225, 0
    %v235 = vsel %vm130, %v226, 0
    %v238 = vsel %vm130, %v227, 0
    %240 = vmatprep.subr.bf16.mxu0 0
    %241 = vmatpush1.bf16.xpose.msra.mxu0 %v229
    %242 = vmatprep.subr.bf16.mxu0 0
    %243 = vmatpush1.bf16.xpose.msra.mxu0 %v232
    %244 = vmatprep.subr.bf16.mxu0 0
    %245 = vmatpush1.bf16.xpose.msra.mxu0 %v235
    %246 = vmatprep.subr.bf16.mxu0 0
    %247 = vmatpush1.bf16.xpose.msra.mxu0 %v238
    %248 = vmatprep.subr.bf16.mxu0 0
    %249 = vmatpush1.bf16.xpose.msra.mxu0 0
    %250 = vmatprep.subr.bf16.mxu0 0
    %251 = vmatpush1.bf16.xpose.msra.mxu0 0
    %252 = vmatprep.subr.bf16.mxu0 0
    %253 = vmatpush1.bf16.xpose.msra.mxu0 0
    %254 = vmatprep.subr.bf16.mxu0 0
    %255 = vmatpush1.bf16.xpose.msra.mxu0 0
    %256 = vmatprep.subr.bf16.mxu0 0
    %257 = vmatpush1.bf16.xpose.msra.mxu0 0
    %258 = vmatprep.subr.bf16.mxu0 0
    %259 = vmatpush1.bf16.xpose.msra.mxu0 0
    %260 = vmatprep.subr.bf16.mxu0 0
    %261 = vmatpush1.bf16.xpose.msra.mxu0 0
    %262 = vmatprep.subr.bf16.mxu0 0
    %263 = vmatpush1.bf16.xpose.msra.mxu0 0
    %264 = vmatprep.subr.bf16.mxu0 0
    %265 = vmatpush1.bf16.xpose.msra.mxu0 0
    %266 = vmatprep.subr.bf16.mxu0 0
    %267 = vmatpush1.bf16.xpose.msra.mxu0 0
    %268 = vmatprep.subr.bf16.mxu0 0
    %269 = vmatpush1.bf16.xpose.msra.mxu0 0
    %270 = vmatprep.subr.bf16.mxu0 0
    %271 = vmatpush1.bf16.xpose.msra.mxu0 0
    %272 = vmatprep.mubr.bf16.mxu0 0
    %273 = vmatmul.mubr.bf16.gmra.mrb[0].mxu0 %v229
    %v274 = vpop.f32.mrb[0].mxu0
    %v275 = vadd.f32 0.0, %v274
    %v276 = vpop.f32.mrb[0].mxu0
    %v277 = vpop.f32.mrb[0].mxu0
    %v278 = vadd.f32 0.0, %v277
    %v279 = vpop.f32.mrb[0].mxu0
    %280 = vmatprep.mubr.bf16.mxu0 0
    %281 = vmatmul.mubr.bf16.gmra.mrb[0].mxu0 %v232
    %v282 = vpop.f32.mrb[0].mxu0
    %v283 = vadd.f32 0.0, %v282
    %v284 = vpop.f32.mrb[0].mxu0
    %v285 = vpop.f32.mrb[0].mxu0
    %v286 = vadd.f32 0.0, %v285
    %v287 = vpop.f32.mrb[0].mxu0
    %288 = vmatprep.mubr.bf16.mxu0 0
    %289 = vmatmul.mubr.bf16.gmra.mrb[0].mxu0 %v235
    %v290 = vpop.f32.mrb[0].mxu0
    %v291 = vadd.f32 0.0, %v290
    %v292 = vpop.f32.mrb[0].mxu0
    %v293 = vpop.f32.mrb[0].mxu0
    %v294 = vadd.f32 0.0, %v293
    %v295 = vpop.f32.mrb[0].mxu0
    %296 = vmatprep.mubr.bf16.mxu0 0
    %297 = vmatmul.mubr.bf16.gmra.mrb[0].mxu0 %v238
    %v298 = vpop.f32.mrb[0].mxu0
    %v299 = vadd.f32 0.0, %v298
    %v300 = vpop.f32.mrb[0].mxu0
    %v301 = vpop.f32.mrb[0].mxu0
    %v302 = vadd.f32 0.0, %v301
    %v303 = vpop.f32.mrb[0].mxu0
    %304 = vdwg.mxu0
    %v313 = vunpack.c.l.b16 %v56
    %v314 = vunpack.c.l.b16 %v57
    %v315 = vunpack.c.l.b16 %v58
    %v316 = vunpack.c.l.b16 %v59
    %v317 = vunpack.c.l.b16 %v60
    %v318 = vunpack.c.l.b16 %v61
    %v319 = vunpack.c.l.b16 %v62
    %v320 = vunpack.c.l.b16 %v63
    %v321 = vpack.c.b16 %v314, %v313
    %v322 = vpack.c.b16 %v316, %v315
    %v323 = vpack.c.b16 %v318, %v317
    %v324 = vpack.c.b16 %v320, %v319
    %v326 = vsel %vm130, %v321, 0
    %v329 = vsel %vm130, %v322, 0
    %v332 = vsel %vm130, %v323, 0
    %v335 = vsel %vm130, %v324, 0
    %337 = vmatprep.subr.bf16.mxu0 0
    %338 = vmatpush1.bf16.xpose.msra.mxu0 %v326
    %339 = vmatprep.subr.bf16.mxu0 0
    %340 = vmatpush1.bf16.xpose.msra.mxu0 %v329
    %341 = vmatprep.subr.bf16.mxu0 0
    %342 = vmatpush1.bf16.xpose.msra.mxu0 %v332
    %343 = vmatprep.subr.bf16.mxu0 0
    %344 = vmatpush1.bf16.xpose.msra.mxu0 %v335
    %345 = vmatprep.subr.bf16.mxu0 0
    %346 = vmatpush1.bf16.xpose.msra.mxu0 0
    %347 = vmatprep.subr.bf16.mxu0 0
    %348 = vmatpush1.bf16.xpose.msra.mxu0 0
    %349 = vmatprep.subr.bf16.mxu0 0
    %350 = vmatpush1.bf16.xpose.msra.mxu0 0
    %351 = vmatprep.subr.bf16.mxu0 0
    %352 = vmatpush1.bf16.xpose.msra.mxu0 0
    %353 = vmatprep.subr.bf16.mxu0 0
    %354 = vmatpush1.bf16.xpose.msra.mxu0 0
    %355 = vmatprep.subr.bf16.mxu0 0
    %356 = vmatpush1.bf16.xpose.msra.mxu0 0
    %357 = vmatprep.subr.bf16.mxu0 0
    %358 = vmatpush1.bf16.xpose.msra.mxu0 0
    %359 = vmatprep.subr.bf16.mxu0 0
    %360 = vmatpush1.bf16.xpose.msra.mxu0 0
    %361 = vmatprep.subr.bf16.mxu0 0
    %362 = vmatpush1.bf16.xpose.msra.mxu0 0
    %363 = vmatprep.subr.bf16.mxu0 0
    %364 = vmatpush1.bf16.xpose.msra.mxu0 0
    %365 = vmatprep.subr.bf16.mxu0 0
    %366 = vmatpush1.bf16.xpose.msra.mxu0 0
    %367 = vmatprep.subr.bf16.mxu0 0
    %368 = vmatpush1.bf16.xpose.msra.mxu0 0
    %369 = vmatprep.mubr.bf16.mxu0 0
    %370 = vmatmul.mubr.bf16.gmra.mrb[0].mxu0 %v326
    %v371 = vpop.f32.mrb[0].mxu0
    %v372 = vadd.f32 0.0, %v371
    %v373 = vpop.f32.mrb[0].mxu0
    %v374 = vpop.f32.mrb[0].mxu0
    %v375 = vadd.f32 0.0, %v374
    %v376 = vpop.f32.mrb[0].mxu0
    %377 = vmatprep.mubr.bf16.mxu0 0
    %378 = vmatmul.mubr.bf16.gmra.mrb[0].mxu0 %v329
    %v379 = vpop.f32.mrb[0].mxu0
    %v380 = vadd.f32 0.0, %v379
    %v381 = vpop.f32.mrb[0].mxu0
    %v382 = vpop.f32.mrb[0].mxu0
    %v383 = vadd.f32 0.0, %v382
    %v384 = vpop.f32.mrb[0].mxu0
    %385 = vmatprep.mubr.bf16.mxu0 0
    %386 = vmatmul.mubr.bf16.gmra.mrb[0].mxu0 %v332
    %v387 = vpop.f32.mrb[0].mxu0
    %v388 = vadd.f32 0.0, %v387
    %v389 = vpop.f32.mrb[0].mxu0
    %v390 = vpop.f32.mrb[0].mxu0
    %v391 = vadd.f32 0.0, %v390
    %v392 = vpop.f32.mrb[0].mxu0
    %393 = vmatprep.mubr.bf16.mxu0 0
    %394 = vmatmul.mubr.bf16.gmra.mrb[0].mxu0 %v335
    %v395 = vpop.f32.mrb[0].mxu0
    %v396 = vadd.f32 0.0, %v395
    %v397 = vpop.f32.mrb[0].mxu0
    %v398 = vpop.f32.mrb[0].mxu0
    %v399 = vadd.f32 0.0, %v398
    %v400 = vpop.f32.mrb[0].mxu0
    %401 = vdwg.mxu0
    %v410 = vunpack.c.l.b16 %v64
    %v411 = vunpack.c.l.b16 %v65
    %v412 = vunpack.c.l.b16 %v66
    %v413 = vunpack.c.l.b16 %v67
    %v414 = vunpack.c.l.b16 %v68
    %v415 = vunpack.c.l.b16 %v69
    %v416 = vunpack.c.l.b16 %v70
    %v417 = vunpack.c.l.b16 %v71
    %v418 = vpack.c.b16 %v411, %v410
    %v419 = vpack.c.b16 %v413, %v412
    %v420 = vpack.c.b16 %v415, %v414
    %v421 = vpack.c.b16 %v417, %v416
    %v423 = vsel %vm130, %v418, 0
    %v426 = vsel %vm130, %v419, 0
    %v429 = vsel %vm130, %v420, 0
    %v432 = vsel %vm130, %v421, 0
    %434 = vmatprep.subr.bf16.mxu0 0
    %435 = vmatpush1.bf16.xpose.msra.mxu0 %v423
    %436 = vmatprep.subr.bf16.mxu0 0
    %437 = vmatpush1.bf16.xpose.msra.mxu0 %v426
    %438 = vmatprep.subr.bf16.mxu0 0
    %439 = vmatpush1.bf16.xpose.msra.mxu0 %v429
    %440 = vmatprep.subr.bf16.mxu0 0
    %441 = vmatpush1.bf16.xpose.msra.mxu0 %v432
    %442 = vmatprep.subr.bf16.mxu0 0
    %443 = vmatpush1.bf16.xpose.msra.mxu0 0
    %444 = vmatprep.subr.bf16.mxu0 0
    %445 = vmatpush1.bf16.xpose.msra.mxu0 0
    %446 = vmatprep.subr.bf16.mxu0 0
    %447 = vmatpush1.bf16.xpose.msra.mxu0 0
    %448 = vmatprep.subr.bf16.mxu0 0
    %449 = vmatpush1.bf16.xpose.msra.mxu0 0
    %450 = vmatprep.subr.bf16.mxu0 0
    %451 = vmatpush1.bf16.xpose.msra.mxu0 0
    %452 = vmatprep.subr.bf16.mxu0 0
    %453 = vmatpush1.bf16.xpose.msra.mxu0 0
    %454 = vmatprep.subr.bf16.mxu0 0
    %455 = vmatpush1.bf16.xpose.msra.mxu0 0
    %456 = vmatprep.subr.bf16.mxu0 0
    %457 = vmatpush1.bf16.xpose.msra.mxu0 0
    %458 = vmatprep.subr.bf16.mxu0 0
    %459 = vmatpush1.bf16.xpose.msra.mxu0 0
    %460 = vmatprep.subr.bf16.mxu0 0
    %461 = vmatpush1.bf16.xpose.msra.mxu0 0
    %462 = vmatprep.subr.bf16.mxu0 0
    %463 = vmatpush1.bf16.xpose.msra.mxu0 0
    %464 = vmatprep.subr.bf16.mxu0 0
    %465 = vmatpush1.bf16.xpose.msra.mxu0 0
    %466 = vmatprep.mubr.bf16.mxu0 0
    %467 = vmatmul.mubr.bf16.gmra.mrb[0].mxu0 %v423
    %v468 = vpop.f32.mrb[0].mxu0
    %v469 = vadd.f32 0.0, %v468
    %v470 = vpop.f32.mrb[0].mxu0
    %v471 = vpop.f32.mrb[0].mxu0
    %v472 = vadd.f32 0.0, %v471
    %v473 = vpop.f32.mrb[0].mxu0
    %474 = vmatprep.mubr.bf16.mxu0 0
    %475 = vmatmul.mubr.bf16.gmra.mrb[0].mxu0 %v426
    %v476 = vpop.f32.mrb[0].mxu0
    %v477 = vadd.f32 0.0, %v476
    %v478 = vpop.f32.mrb[0].mxu0
    %v479 = vpop.f32.mrb[0].mxu0
    %v480 = vadd.f32 0.0, %v479
    %v481 = vpop.f32.mrb[0].mxu0
    %482 = vmatprep.mubr.bf16.mxu0 0
    %483 = vmatmul.mubr.bf16.gmra.mrb[0].mxu0 %v429
    %v484 = vpop.f32.mrb[0].mxu0
    %v485 = vadd.f32 0.0, %v484
    %v486 = vpop.f32.mrb[0].mxu0
    %v487 = vpop.f32.mrb[0].mxu0
    %v488 = vadd.f32 0.0, %v487
    %v489 = vpop.f32.mrb[0].mxu0
    %490 = vmatprep.mubr.bf16.mxu0 0
    %491 = vmatmul.mubr.bf16.gmra.mrb[0].mxu0 %v432
    %v492 = vpop.f32.mrb[0].mxu0
    %v493 = vadd.f32 0.0, %v492
    %v494 = vpop.f32.mrb[0].mxu0
    %v495 = vpop.f32.mrb[0].mxu0
    %v496 = vadd.f32 0.0, %v495
    %v497 = vpop.f32.mrb[0].mxu0
    %498 = vdwg.mxu0
    %v507 = vunpack.c.l.b16 %v72
    %v508 = vunpack.c.l.b16 %v73
    %v509 = vunpack.c.l.b16 %v74
    %v510 = vunpack.c.l.b16 %v75
    %v511 = vunpack.c.l.b16 %v76
    %v512 = vunpack.c.l.b16 %v77
    %v513 = vunpack.c.l.b16 %v78
    %v514 = vunpack.c.l.b16 %v79
    %v515 = vpack.c.b16 %v508, %v507
    %v516 = vpack.c.b16 %v510, %v509
    %v517 = vpack.c.b16 %v512, %v511
    %v518 = vpack.c.b16 %v514, %v513
    %v520 = vsel %vm130, %v515, 0
    %v523 = vsel %vm130, %v516, 0
    %v526 = vsel %vm130, %v517, 0
    %v529 = vsel %vm130, %v518, 0
    %531 = vmatprep.subr.bf16.mxu0 0
    %532 = vmatpush1.bf16.xpose.msra.mxu0 %v520
    %533 = vmatprep.subr.bf16.mxu0 0
    %534 = vmatpush1.bf16.xpose.msra.mxu0 %v523
    %535 = vmatprep.subr.bf16.mxu0 0
    %536 = vmatpush1.bf16.xpose.msra.mxu0 %v526
    %537 = vmatprep.subr.bf16.mxu0 0
    %538 = vmatpush1.bf16.xpose.msra.mxu0 %v529
    %539 = vmatprep.subr.bf16.mxu0 0
    %540 = vmatpush1.bf16.xpose.msra.mxu0 0
    %541 = vmatprep.subr.bf16.mxu0 0
    %542 = vmatpush1.bf16.xpose.msra.mxu0 0
    %543 = vmatprep.subr.bf16.mxu0 0
    %544 = vmatpush1.bf16.xpose.msra.mxu0 0
    %545 = vmatprep.subr.bf16.mxu0 0
    %546 = vmatpush1.bf16.xpose.msra.mxu0 0
    %547 = vmatprep.subr.bf16.mxu0 0
    %548 = vmatpush1.bf16.xpose.msra.mxu0 0
    %549 = vmatprep.subr.bf16.mxu0 0
    %550 = vmatpush1.bf16.xpose.msra.mxu0 0
    %551 = vmatprep.subr.bf16.mxu0 0
    %552 = vmatpush1.bf16.xpose.msra.mxu0 0
    %553 = vmatprep.subr.bf16.mxu0 0
    %554 = vmatpush1.bf16.xpose.msra.mxu0 0
    %555 = vmatprep.subr.bf16.mxu0 0
    %556 = vmatpush1.bf16.xpose.msra.mxu0 0
    %557 = vmatprep.subr.bf16.mxu0 0
    %558 = vmatpush1.bf16.xpose.msra.mxu0 0
    %559 = vmatprep.subr.bf16.mxu0 0
    %560 = vmatpush1.bf16.xpose.msra.mxu0 0
    %561 = vmatprep.subr.bf16.mxu0 0
    %562 = vmatpush1.bf16.xpose.msra.mxu0 0
    %563 = vmatprep.mubr.bf16.mxu0 0
    %564 = vmatmul.mubr.bf16.gmra.mrb[0].mxu0 %v520
    %v565 = vpop.f32.mrb[0].mxu0
    %v566 = vadd.f32 0.0, %v565
    %v567 = vpop.f32.mrb[0].mxu0
    %v568 = vpop.f32.mrb[0].mxu0
    %v569 = vadd.f32 0.0, %v568
    %v570 = vpop.f32.mrb[0].mxu0
    %571 = vmatprep.mubr.bf16.mxu0 0
    %572 = vmatmul.mubr.bf16.gmra.mrb[0].mxu0 %v523
    %v573 = vpop.f32.mrb[0].mxu0
    %v574 = vadd.f32 0.0, %v573
    %v575 = vpop.f32.mrb[0].mxu0
    %v576 = vpop.f32.mrb[0].mxu0
    %v577 = vadd.f32 0.0, %v576
    %v578 = vpop.f32.mrb[0].mxu0
    %579 = vmatprep.mubr.bf16.mxu0 0
    %580 = vmatmul.mubr.bf16.gmra.mrb[0].mxu0 %v526
    %v581 = vpop.f32.mrb[0].mxu0
    %v582 = vadd.f32 0.0, %v581
    %v583 = vpop.f32.mrb[0].mxu0
    %v584 = vpop.f32.mrb[0].mxu0
    %v585 = vadd.f32 0.0, %v584
    %v586 = vpop.f32.mrb[0].mxu0
    %587 = vmatprep.mubr.bf16.mxu0 0
    %588 = vmatmul.mubr.bf16.gmra.mrb[0].mxu0 %v529
    %v589 = vpop.f32.mrb[0].mxu0
    %v590 = vadd.f32 0.0, %v589
    %v591 = vpop.f32.mrb[0].mxu0
    %v592 = vpop.f32.mrb[0].mxu0
    %v593 = vadd.f32 0.0, %v592
    %v594 = vpop.f32.mrb[0].mxu0
    %595 = vdwg.mxu0
    %v604 = vunpack.c.l.b16 %v80
    %v605 = vunpack.c.l.b16 %v81
    %v606 = vunpack.c.l.b16 %v82
    %v607 = vunpack.c.l.b16 %v83
    %v608 = vunpack.c.l.b16 %v84
    %v609 = vunpack.c.l.b16 %v85
    %v610 = vunpack.c.l.b16 %v86
    %v611 = vunpack.c.l.b16 %v87
    %v612 = vpack.c.b16 %v605, %v604
    %v613 = vpack.c.b16 %v607, %v606
    %v614 = vpack.c.b16 %v609, %v608
    %v615 = vpack.c.b16 %v611, %v610
    %v617 = vsel %vm130, %v612, 0
    %v620 = vsel %vm130, %v613, 0
    %v623 = vsel %vm130, %v614, 0
    %v626 = vsel %vm130, %v615, 0
    %628 = vmatprep.subr.bf16.mxu0 0
    %629 = vmatpush1.bf16.xpose.msra.mxu0 %v617
    %630 = vmatprep.subr.bf16.mxu0 0
    %631 = vmatpush1.bf16.xpose.msra.mxu0 %v620
    %632 = vmatprep.subr.bf16.mxu0 0
    %633 = vmatpush1.bf16.xpose.msra.mxu0 %v623
    %634 = vmatprep.subr.bf16.mxu0 0
    %635 = vmatpush1.bf16.xpose.msra.mxu0 %v626
    %636 = vmatprep.subr.bf16.mxu0 0
    %637 = vmatpush1.bf16.xpose.msra.mxu0 0
    %638 = vmatprep.subr.bf16.mxu0 0
    %639 = vmatpush1.bf16.xpose.msra.mxu0 0
    %640 = vmatprep.subr.bf16.mxu0 0
    %641 = vmatpush1.bf16.xpose.msra.mxu0 0
    %642 = vmatprep.subr.bf16.mxu0 0
    %643 = vmatpush1.bf16.xpose.msra.mxu0 0
    %644 = vmatprep.subr.bf16.mxu0 0
    %645 = vmatpush1.bf16.xpose.msra.mxu0 0
    %646 = vmatprep.subr.bf16.mxu0 0
    %647 = vmatpush1.bf16.xpose.msra.mxu0 0
    %648 = vmatprep.subr.bf16.mxu0 0
    %649 = vmatpush1.bf16.xpose.msra.mxu0 0
    %650 = vmatprep.subr.bf16.mxu0 0
    %651 = vmatpush1.bf16.xpose.msra.mxu0 0
    %652 = vmatprep.subr.bf16.mxu0 0
    %653 = vmatpush1.bf16.xpose.msra.mxu0 0
    %654 = vmatprep.subr.bf16.mxu0 0
    %655 = vmatpush1.bf16.xpose.msra.mxu0 0
    %656 = vmatprep.subr.bf16.mxu0 0
    %657 = vmatpush1.bf16.xpose.msra.mxu0 0
    %658 = vmatprep.subr.bf16.mxu0 0
    %659 = vmatpush1.bf16.xpose.msra.mxu0 0
    %660 = vmatprep.mubr.bf16.mxu0 0
    %661 = vmatmul.mubr.bf16.gmra.mrb[0].mxu0 %v617
    %v662 = vpop.f32.mrb[0].mxu0
    %v663 = vadd.f32 0.0, %v662
    %v664 = vpop.f32.mrb[0].mxu0
    %v665 = vpop.f32.mrb[0].mxu0
    %v666 = vadd.f32 0.0, %v665
    %v667 = vpop.f32.mrb[0].mxu0
    %668 = vmatprep.mubr.bf16.mxu0 0
    %669 = vmatmul.mubr.bf16.gmra.mrb[0].mxu0 %v620
    %v670 = vpop.f32.mrb[0].mxu0
    %v671 = vadd.f32 0.0, %v670
    %v672 = vpop.f32.mrb[0].mxu0
    %v673 = vpop.f32.mrb[0].mxu0
    %v674 = vadd.f32 0.0, %v673
    %v675 = vpop.f32.mrb[0].mxu0
    %676 = vmatprep.mubr.bf16.mxu0 0
    %677 = vmatmul.mubr.bf16.gmra.mrb[0].mxu0 %v623
    %v678 = vpop.f32.mrb[0].mxu0
    %v679 = vadd.f32 0.0, %v678
    %v680 = vpop.f32.mrb[0].mxu0
    %v681 = vpop.f32.mrb[0].mxu0
    %v682 = vadd.f32 0.0, %v681
    %v683 = vpop.f32.mrb[0].mxu0
    %684 = vmatprep.mubr.bf16.mxu0 0
    %685 = vmatmul.mubr.bf16.gmra.mrb[0].mxu0 %v626
    %v686 = vpop.f32.mrb[0].mxu0
    %v687 = vadd.f32 0.0, %v686
    %v688 = vpop.f32.mrb[0].mxu0
    %v689 = vpop.f32.mrb[0].mxu0
    %v690 = vadd.f32 0.0, %v689
    %v691 = vpop.f32.mrb[0].mxu0
    %692 = vdwg.mxu0
    %v701 = vunpack.c.l.b16 %v88
    %v702 = vunpack.c.l.b16 %v89
    %v703 = vunpack.c.l.b16 %v90
    %v704 = vunpack.c.l.b16 %v91
    %v705 = vunpack.c.l.b16 %v92
    %v706 = vunpack.c.l.b16 %v93
    %v707 = vunpack.c.l.b16 %v94
    %v708 = vunpack.c.l.b16 %v95
    %v709 = vpack.c.b16 %v702, %v701
    %v710 = vpack.c.b16 %v704, %v703
    %v711 = vpack.c.b16 %v706, %v705
    %v712 = vpack.c.b16 %v708, %v707
    %v714 = vsel %vm130, %v709, 0
    %v717 = vsel %vm130, %v710, 0
    %v720 = vsel %vm130, %v711, 0
    %v723 = vsel %vm130, %v712, 0
    %725 = vmatprep.subr.bf16.mxu0 0
    %726 = vmatpush1.bf16.xpose.msra.mxu0 %v714
    %727 = vmatprep.subr.bf16.mxu0 0
    %728 = vmatpush1.bf16.xpose.msra.mxu0 %v717
    %729 = vmatprep.subr.bf16.mxu0 0
    %730 = vmatpush1.bf16.xpose.msra.mxu0 %v720
    %731 = vmatprep.subr.bf16.mxu0 0
    %732 = vmatpush1.bf16.xpose.msra.mxu0 %v723
    %733 = vmatprep.subr.bf16.mxu0 0
    %734 = vmatpush1.bf16.xpose.msra.mxu0 0
    %735 = vmatprep.subr.bf16.mxu0 0
    %736 = vmatpush1.bf16.xpose.msra.mxu0 0
    %737 = vmatprep.subr.bf16.mxu0 0
    %738 = vmatpush1.bf16.xpose.msra.mxu0 0
    %739 = vmatprep.subr.bf16.mxu0 0
    %740 = vmatpush1.bf16.xpose.msra.mxu0 0
    %741 = vmatprep.subr.bf16.mxu0 0
    %742 = vmatpush1.bf16.xpose.msra.mxu0 0
    %743 = vmatprep.subr.bf16.mxu0 0
    %744 = vmatpush1.bf16.xpose.msra.mxu0 0
    %745 = vmatprep.subr.bf16.mxu0 0
    %746 = vmatpush1.bf16.xpose.msra.mxu0 0
    %747 = vmatprep.subr.bf16.mxu0 0
    %748 = vmatpush1.bf16.xpose.msra.mxu0 0
    %749 = vmatprep.subr.bf16.mxu0 0
    %750 = vmatpush1.bf16.xpose.msra.mxu0 0
    %751 = vmatprep.subr.bf16.mxu0 0
    %752 = vmatpush1.bf16.xpose.msra.mxu0 0
    %753 = vmatprep.subr.bf16.mxu0 0
    %754 = vmatpush1.bf16.xpose.msra.mxu0 0
    %755 = vmatprep.subr.bf16.mxu0 0
    %756 = vmatpush1.bf16.xpose.msra.mxu0 0
    %757 = vmatprep.mubr.bf16.mxu0 0
    %758 = vmatmul.mubr.bf16.gmra.mrb[0].mxu0 %v714
    %v759 = vpop.f32.mrb[0].mxu0
    %v760 = vadd.f32 0.0, %v759
    %v761 = vpop.f32.mrb[0].mxu0
    %v762 = vpop.f32.mrb[0].mxu0
    %v763 = vadd.f32 0.0, %v762
    %v764 = vpop.f32.mrb[0].mxu0
    %765 = vmatprep.mubr.bf16.mxu0 0
    %766 = vmatmul.mubr.bf16.gmra.mrb[0].mxu0 %v717
    %v767 = vpop.f32.mrb[0].mxu0
    %v768 = vadd.f32 0.0, %v767
    %v769 = vpop.f32.mrb[0].mxu0
    %v770 = vpop.f32.mrb[0].mxu0
    %v771 = vadd.f32 0.0, %v770
    %v772 = vpop.f32.mrb[0].mxu0
    %773 = vmatprep.mubr.bf16.mxu0 0
    %774 = vmatmul.mubr.bf16.gmra.mrb[0].mxu0 %v720
    %v775 = vpop.f32.mrb[0].mxu0
    %v776 = vadd.f32 0.0, %v775
    %v777 = vpop.f32.mrb[0].mxu0
    %v778 = vpop.f32.mrb[0].mxu0
    %v779 = vadd.f32 0.0, %v778
    %v780 = vpop.f32.mrb[0].mxu0
    %781 = vmatprep.mubr.bf16.mxu0 0
    %782 = vmatmul.mubr.bf16.gmra.mrb[0].mxu0 %v723
    %v783 = vpop.f32.mrb[0].mxu0
    %v784 = vadd.f32 0.0, %v783
    %v785 = vpop.f32.mrb[0].mxu0
    %v786 = vpop.f32.mrb[0].mxu0
    %v787 = vadd.f32 0.0, %v786
    %v788 = vpop.f32.mrb[0].mxu0
    %789 = vdwg.mxu0
    %v798 = vunpack.c.l.b16 %v96
    %v799 = vunpack.c.l.b16 %v97
    %v800 = vunpack.c.l.b16 %v98
    %v801 = vunpack.c.l.b16 %v99
    %v802 = vunpack.c.l.b16 %v100
    %v803 = vunpack.c.l.b16 %v101
    %v804 = vunpack.c.l.b16 %v102
    %v805 = vunpack.c.l.b16 %v103
    %v806 = vpack.c.b16 %v799, %v798
    %v807 = vpack.c.b16 %v801, %v800
    %v808 = vpack.c.b16 %v803, %v802
    %v809 = vpack.c.b16 %v805, %v804
    %v811 = vsel %vm130, %v806, 0
    %v814 = vsel %vm130, %v807, 0
    %v817 = vsel %vm130, %v808, 0
    %v820 = vsel %vm130, %v809, 0
    %822 = vmatprep.subr.bf16.mxu0 0
    %823 = vmatpush1.bf16.xpose.msra.mxu0 %v811
    %824 = vmatprep.subr.bf16.mxu0 0
    %825 = vmatpush1.bf16.xpose.msra.mxu0 %v814
    %826 = vmatprep.subr.bf16.mxu0 0
    %827 = vmatpush1.bf16.xpose.msra.mxu0 %v817
    %828 = vmatprep.subr.bf16.mxu0 0
    %829 = vmatpush1.bf16.xpose.msra.mxu0 %v820
    %830 = vmatprep.subr.bf16.mxu0 0
    %831 = vmatpush1.bf16.xpose.msra.mxu0 0
    %832 = vmatprep.subr.bf16.mxu0 0
    %833 = vmatpush1.bf16.xpose.msra.mxu0 0
    %834 = vmatprep.subr.bf16.mxu0 0
    %835 = vmatpush1.bf16.xpose.msra.mxu0 0
    %836 = vmatprep.subr.bf16.mxu0 0
    %837 = vmatpush1.bf16.xpose.msra.mxu0 0
    %838 = vmatprep.subr.bf16.mxu0 0
    %839 = vmatpush1.bf16.xpose.msra.mxu0 0
    %840 = vmatprep.subr.bf16.mxu0 0
    %841 = vmatpush1.bf16.xpose.msra.mxu0 0
    %842 = vmatprep.subr.bf16.mxu0 0
    %843 = vmatpush1.bf16.xpose.msra.mxu0 0
    %844 = vmatprep.subr.bf16.mxu0 0
    %845 = vmatpush1.bf16.xpose.msra.mxu0 0
    %846 = vmatprep.subr.bf16.mxu0 0
    %847 = vmatpush1.bf16.xpose.msra.mxu0 0
    %848 = vmatprep.subr.bf16.mxu0 0
    %849 = vmatpush1.bf16.xpose.msra.mxu0 0
    %850 = vmatprep.subr.bf16.mxu0 0
    %851 = vmatpush1.bf16.xpose.msra.mxu0 0
    %852 = vmatprep.subr.bf16.mxu0 0
    %853 = vmatpush1.bf16.xpose.msra.mxu0 0
    %854 = vmatprep.mubr.bf16.mxu0 0
    %855 = vmatmul.mubr.bf16.gmra.mrb[0].mxu0 %v811
    %v856 = vpop.f32.mrb[0].mxu0
    %v857 = vadd.f32 0.0, %v856
    %v858 = vpop.f32.mrb[0].mxu0
    %v859 = vpop.f32.mrb[0].mxu0
    %v860 = vadd.f32 0.0, %v859
    %v861 = vpop.f32.mrb[0].mxu0
    %862 = vmatprep.mubr.bf16.mxu0 0
    %863 = vmatmul.mubr.bf16.gmra.mrb[0].mxu0 %v814
    %v864 = vpop.f32.mrb[0].mxu0
    %v865 = vadd.f32 0.0, %v864
    %v866 = vpop.f32.mrb[0].mxu0
    %v867 = vpop.f32.mrb[0].mxu0
    %v868 = vadd.f32 0.0, %v867
    %v869 = vpop.f32.mrb[0].mxu0
    %870 = vmatprep.mubr.bf16.mxu0 0
    %871 = vmatmul.mubr.bf16.gmra.mrb[0].mxu0 %v817
    %v872 = vpop.f32.mrb[0].mxu0
    %v873 = vadd.f32 0.0, %v872
    %v874 = vpop.f32.mrb[0].mxu0
    %v875 = vpop.f32.mrb[0].mxu0
    %v876 = vadd.f32 0.0, %v875
    %v877 = vpop.f32.mrb[0].mxu0
    %878 = vmatprep.mubr.bf16.mxu0 0
    %879 = vmatmul.mubr.bf16.gmra.mrb[0].mxu0 %v820
    %v880 = vpop.f32.mrb[0].mxu0
    %v881 = vadd.f32 0.0, %v880
    %v882 = vpop.f32.mrb[0].mxu0
    %v883 = vpop.f32.mrb[0].mxu0
    %v884 = vadd.f32 0.0, %v883
    %v885 = vpop.f32.mrb[0].mxu0
    %886 = vdwg.mxu0
    %v887 = vunpack.c.l.bf16 %v40
    %v888 = vunpack.c.l.bf16 %v41
    %v889 = vunpack.c.l.bf16 %v42
    %v890 = vunpack.c.l.bf16 %v43
    %v891 = vunpack.c.l.bf16 %v44
    %v892 = vunpack.c.l.bf16 %v45
    %v893 = vunpack.c.l.bf16 %v46
    %v894 = vunpack.c.l.bf16 %v47
    %v895 = vunpack.c.l.bf16 %v48
    %v896 = vunpack.c.l.bf16 %v49
    %v897 = vunpack.c.l.bf16 %v50
    %v898 = vunpack.c.l.bf16 %v51
    %v899 = vunpack.c.l.bf16 %v52
    %v900 = vunpack.c.l.bf16 %v53
    %v901 = vunpack.c.l.bf16 %v54
    %v902 = vunpack.c.l.bf16 %v55
    %v903 = vunpack.c.l.bf16 %v56
    %v904 = vunpack.c.l.bf16 %v57
    %v905 = vunpack.c.l.bf16 %v58
    %v906 = vunpack.c.l.bf16 %v59
    %v907 = vunpack.c.l.bf16 %v60
    %v908 = vunpack.c.l.bf16 %v61
    %v909 = vunpack.c.l.bf16 %v62
    %v910 = vunpack.c.l.bf16 %v63
    %v911 = vunpack.c.l.bf16 %v64
    %v912 = vunpack.c.l.bf16 %v65
    %v913 = vunpack.c.l.bf16 %v66
    %v914 = vunpack.c.l.bf16 %v67
    %v915 = vunpack.c.l.bf16 %v68
    %v916 = vunpack.c.l.bf16 %v69
    %v917 = vunpack.c.l.bf16 %v70
    %v918 = vunpack.c.l.bf16 %v71
    %v919 = vunpack.c.l.bf16 %v72
    %v920 = vunpack.c.l.bf16 %v73
    %v921 = vunpack.c.l.bf16 %v74
    %v922 = vunpack.c.l.bf16 %v75
    %v923 = vunpack.c.l.bf16 %v76
    %v924 = vunpack.c.l.bf16 %v77
    %v925 = vunpack.c.l.bf16 %v78
    %v926 = vunpack.c.l.bf16 %v79
    %v927 = vunpack.c.l.bf16 %v80
    %v928 = vunpack.c.l.bf16 %v81
    %v929 = vunpack.c.l.bf16 %v82
    %v930 = vunpack.c.l.bf16 %v83
    %v931 = vunpack.c.l.bf16 %v84
    %v932 = vunpack.c.l.bf16 %v85
    %v933 = vunpack.c.l.bf16 %v86
    %v934 = vunpack.c.l.bf16 %v87
    %v935 = vunpack.c.l.bf16 %v88
    %v936 = vunpack.c.l.bf16 %v89
    %v937 = vunpack.c.l.bf16 %v90
    %v938 = vunpack.c.l.bf16 %v91
    %v939 = vunpack.c.l.bf16 %v92
    %v940 = vunpack.c.l.bf16 %v93
    %v941 = vunpack.c.l.bf16 %v94
    %v942 = vunpack.c.l.bf16 %v95
    %v943 = vunpack.c.l.bf16 %v96
    %v944 = vunpack.c.l.bf16 %v97
    %v945 = vunpack.c.l.bf16 %v98
    %v946 = vunpack.c.l.bf16 %v99
    %v947 = vunpack.c.l.bf16 %v100
    %v948 = vunpack.c.l.bf16 %v101
    %v949 = vunpack.c.l.bf16 %v102
    %v950 = vunpack.c.l.bf16 %v103
    %v951 = vmul.f32 %v178, %v178
    %v952 = vmul.f32 %v181, %v181
    %v953 = vmul.f32 %v186, %v186
    %v954 = vmul.f32 %v189, %v189
    %v955 = vmul.f32 %v194, %v194
    %v956 = vmul.f32 %v197, %v197
    %v957 = vmul.f32 %v202, %v202
    %v958 = vmul.f32 %v205, %v205
    %v959 = vmul.f32 %v275, %v275
    %v960 = vmul.f32 %v278, %v278
    %v961 = vmul.f32 %v283, %v283
    %v962 = vmul.f32 %v286, %v286
    %v963 = vmul.f32 %v291, %v291
    %v964 = vmul.f32 %v294, %v294
    %v965 = vmul.f32 %v299, %v299
    %v966 = vmul.f32 %v302, %v302
    %v967 = vmul.f32 %v372, %v372
    %v968 = vmul.f32 %v375, %v375
    %v969 = vmul.f32 %v380, %v380
    %v970 = vmul.f32 %v383, %v383
    %v971 = vmul.f32 %v388, %v388
    %v972 = vmul.f32 %v391, %v391
    %v973 = vmul.f32 %v396, %v396
    %v974 = vmul.f32 %v399, %v399
    %v975 = vmul.f32 %v469, %v469
    %v976 = vmul.f32 %v472, %v472
    %v977 = vmul.f32 %v477, %v477
    %v978 = vmul.f32 %v480, %v480
    %v979 = vmul.f32 %v485, %v485
    %v980 = vmul.f32 %v488, %v488
    %v981 = vmul.f32 %v493, %v493
    %v982 = vmul.f32 %v496, %v496
    %v983 = vmul.f32 %v566, %v566
    %v984 = vmul.f32 %v569, %v569
    %v985 = vmul.f32 %v574, %v574
    %v986 = vmul.f32 %v577, %v577
    %v987 = vmul.f32 %v582, %v582
    %v988 = vmul.f32 %v585, %v585
    %v989 = vmul.f32 %v590, %v590
    %v990 = vmul.f32 %v593, %v593
    %v991 = vmul.f32 %v663, %v663
    %v992 = vmul.f32 %v666, %v666
    %v993 = vmul.f32 %v671, %v671
    %v994 = vmul.f32 %v674, %v674
    %v995 = vmul.f32 %v679, %v679
    %v996 = vmul.f32 %v682, %v682
    %v997 = vmul.f32 %v687, %v687
    %v998 = vmul.f32 %v690, %v690
    %v999 = vmul.f32 %v760, %v760
    %v1000 = vmul.f32 %v763, %v763
    %v1001 = vmul.f32 %v768, %v768
    %v1002 = vmul.f32 %v771, %v771
    %v1003 = vmul.f32 %v776, %v776
    %v1004 = vmul.f32 %v779, %v779
    %v1005 = vmul.f32 %v784, %v784
    %v1006 = vmul.f32 %v787, %v787
    %v1007 = vmul.f32 %v857, %v857
    %v1008 = vmul.f32 %v860, %v860
    %v1009 = vmul.f32 %v865, %v865
    %v1010 = vmul.f32 %v868, %v868
    %v1011 = vmul.f32 %v873, %v873
    %v1012 = vmul.f32 %v876, %v876
    %v1013 = vmul.f32 %v881, %v881
    %v1014 = vmul.f32 %v884, %v884
    %v1015 = vsel %vm130, %v951, 0.0
    %1016 = vadd.xlane.f32.xlu0 %v1015
    %v1017 = vpop.xlane.xlu0 %1016
    %v1018 = vsel %vm130, %v952, 0.0
    %1019 = vadd.xlane.f32.xlu0 %v1018
    %v1020 = vpop.xlane.xlu0 %1019
    %v1021 = vsel %vm130, %v953, 0.0
    %1022 = vadd.xlane.f32.xlu0 %v1021
    %v1023 = vpop.xlane.xlu0 %1022
    %v1024 = vsel %vm130, %v954, 0.0
    %1025 = vadd.xlane.f32.xlu0 %v1024
    %v1026 = vpop.xlane.xlu0 %1025
    %v1027 = vsel %vm130, %v955, 0.0
    %1028 = vadd.xlane.f32.xlu0 %v1027
    %v1029 = vpop.xlane.xlu0 %1028
    %v1030 = vsel %vm130, %v956, 0.0
    %1031 = vadd.xlane.f32.xlu0 %v1030
    %v1032 = vpop.xlane.xlu0 %1031
    %v1033 = vsel %vm130, %v957, 0.0
    %1034 = vadd.xlane.f32.xlu0 %v1033
    %v1035 = vpop.xlane.xlu0 %1034
    %v1036 = vsel %vm130, %v958, 0.0
    %1037 = vadd.xlane.f32.xlu0 %v1036
    %v1038 = vpop.xlane.xlu0 %1037
    %v1039 = vsel %vm130, %v959, 0.0
    %1040 = vadd.xlane.f32.xlu0 %v1039
    %v1041 = vpop.xlane.xlu0 %1040
    %v1042 = vsel %vm130, %v960, 0.0
    %1043 = vadd.xlane.f32.xlu0 %v1042
    %v1044 = vpop.xlane.xlu0 %1043
    %v1045 = vsel %vm130, %v961, 0.0
    %1046 = vadd.xlane.f32.xlu0 %v1045
    %v1047 = vpop.xlane.xlu0 %1046
    %v1048 = vsel %vm130, %v962, 0.0
    %1049 = vadd.xlane.f32.xlu0 %v1048
    %v1050 = vpop.xlane.xlu0 %1049
    %v1051 = vsel %vm130, %v963, 0.0
    %1052 = vadd.xlane.f32.xlu0 %v1051
    %v1053 = vpop.xlane.xlu0 %1052
    %v1054 = vsel %vm130, %v964, 0.0
    %1055 = vadd.xlane.f32.xlu0 %v1054
    %v1056 = vpop.xlane.xlu0 %1055
    %v1057 = vsel %vm130, %v965, 0.0
    %1058 = vadd.xlane.f32.xlu0 %v1057
    %v1059 = vpop.xlane.xlu0 %1058
    %v1060 = vsel %vm130, %v966, 0.0
    %1061 = vadd.xlane.f32.xlu0 %v1060
    %v1062 = vpop.xlane.xlu0 %1061
    %v1063 = vsel %vm130, %v967, 0.0
    %1064 = vadd.xlane.f32.xlu0 %v1063
    %v1065 = vpop.xlane.xlu0 %1064
    %v1066 = vsel %vm130, %v968, 0.0
    %1067 = vadd.xlane.f32.xlu0 %v1066
    %v1068 = vpop.xlane.xlu0 %1067
    %v1069 = vsel %vm130, %v969, 0.0
    %1070 = vadd.xlane.f32.xlu0 %v1069
    %v1071 = vpop.xlane.xlu0 %1070
    %v1072 = vsel %vm130, %v970, 0.0
    %1073 = vadd.xlane.f32.xlu0 %v1072
    %v1074 = vpop.xlane.xlu0 %1073
    %v1075 = vsel %vm130, %v971, 0.0
    %1076 = vadd.xlane.f32.xlu0 %v1075
    %v1077 = vpop.xlane.xlu0 %1076
    %v1078 = vsel %vm130, %v972, 0.0
    %1079 = vadd.xlane.f32.xlu0 %v1078
    %v1080 = vpop.xlane.xlu0 %1079
    %v1081 = vsel %vm130, %v973, 0.0
    %1082 = vadd.xlane.f32.xlu0 %v1081
    %v1083 = vpop.xlane.xlu0 %1082
    %v1084 = vsel %vm130, %v974, 0.0
    %1085 = vadd.xlane.f32.xlu0 %v1084
    %v1086 = vpop.xlane.xlu0 %1085
    %v1087 = vsel %vm130, %v975, 0.0
    %1088 = vadd.xlane.f32.xlu0 %v1087
    %v1089 = vpop.xlane.xlu0 %1088
    %v1090 = vsel %vm130, %v976, 0.0
    %1091 = vadd.xlane.f32.xlu0 %v1090
    %v1092 = vpop.xlane.xlu0 %1091
    %v1093 = vsel %vm130, %v977, 0.0
    %1094 = vadd.xlane.f32.xlu0 %v1093
    %v1095 = vpop.xlane.xlu0 %1094
    %v1096 = vsel %vm130, %v978, 0.0
    %1097 = vadd.xlane.f32.xlu0 %v1096
    %v1098 = vpop.xlane.xlu0 %1097
    %v1099 = vsel %vm130, %v979, 0.0
    %1100 = vadd.xlane.f32.xlu0 %v1099
    %v1101 = vpop.xlane.xlu0 %1100
    %v1102 = vsel %vm130, %v980, 0.0
    %1103 = vadd.xlane.f32.xlu0 %v1102
    %v1104 = vpop.xlane.xlu0 %1103
    %v1105 = vsel %vm130, %v981, 0.0
    %1106 = vadd.xlane.f32.xlu0 %v1105
    %v1107 = vpop.xlane.xlu0 %1106
    %v1108 = vsel %vm130, %v982, 0.0
    %1109 = vadd.xlane.f32.xlu0 %v1108
    %v1110 = vpop.xlane.xlu0 %1109
    %v1111 = vsel %vm130, %v983, 0.0
    %1112 = vadd.xlane.f32.xlu0 %v1111
    %v1113 = vpop.xlane.xlu0 %1112
    %v1114 = vsel %vm130, %v984, 0.0
    %1115 = vadd.xlane.f32.xlu0 %v1114
    %v1116 = vpop.xlane.xlu0 %1115
    %v1117 = vsel %vm130, %v985, 0.0
    %1118 = vadd.xlane.f32.xlu0 %v1117
    %v1119 = vpop.xlane.xlu0 %1118
    %v1120 = vsel %vm130, %v986, 0.0
    %1121 = vadd.xlane.f32.xlu0 %v1120
    %v1122 = vpop.xlane.xlu0 %1121
    %v1123 = vsel %vm130, %v987, 0.0
    %1124 = vadd.xlane.f32.xlu0 %v1123
    %v1125 = vpop.xlane.xlu0 %1124
    %v1126 = vsel %vm130, %v988, 0.0
    %1127 = vadd.xlane.f32.xlu0 %v1126
    %v1128 = vpop.xlane.xlu0 %1127
    %v1129 = vsel %vm130, %v989, 0.0
    %1130 = vadd.xlane.f32.xlu0 %v1129
    %v1131 = vpop.xlane.xlu0 %1130
    %v1132 = vsel %vm130, %v990, 0.0
    %1133 = vadd.xlane.f32.xlu0 %v1132
    %v1134 = vpop.xlane.xlu0 %1133
    %v1135 = vsel %vm130, %v991, 0.0
    %1136 = vadd.xlane.f32.xlu0 %v1135
    %v1137 = vpop.xlane.xlu0 %1136
    %v1138 = vsel %vm130, %v992, 0.0
    %1139 = vadd.xlane.f32.xlu0 %v1138
    %v1140 = vpop.xlane.xlu0 %1139
    %v1141 = vsel %vm130, %v993, 0.0
    %1142 = vadd.xlane.f32.xlu0 %v1141
    %v1143 = vpop.xlane.xlu0 %1142
    %v1144 = vsel %vm130, %v994, 0.0
    %1145 = vadd.xlane.f32.xlu0 %v1144
    %v1146 = vpop.xlane.xlu0 %1145
    %v1147 = vsel %vm130, %v995, 0.0
    %1148 = vadd.xlane.f32.xlu0 %v1147
    %v1149 = vpop.xlane.xlu0 %1148
    %v1150 = vsel %vm130, %v996, 0.0
    %1151 = vadd.xlane.f32.xlu0 %v1150
    %v1152 = vpop.xlane.xlu0 %1151
    %v1153 = vsel %vm130, %v997, 0.0
    %1154 = vadd.xlane.f32.xlu0 %v1153
    %v1155 = vpop.xlane.xlu0 %1154
    %v1156 = vsel %vm130, %v998, 0.0
    %1157 = vadd.xlane.f32.xlu0 %v1156
    %v1158 = vpop.xlane.xlu0 %1157
    %v1159 = vsel %vm130, %v999, 0.0
    %1160 = vadd.xlane.f32.xlu0 %v1159
    %v1161 = vpop.xlane.xlu0 %1160
    %v1162 = vsel %vm130, %v1000, 0.0
    %1163 = vadd.xlane.f32.xlu0 %v1162
    %v1164 = vpop.xlane.xlu0 %1163
    %v1165 = vsel %vm130, %v1001, 0.0
    %1166 = vadd.xlane.f32.xlu0 %v1165
    %v1167 = vpop.xlane.xlu0 %1166
    %v1168 = vsel %vm130, %v1002, 0.0
    %1169 = vadd.xlane.f32.xlu0 %v1168
    %v1170 = vpop.xlane.xlu0 %1169
    %v1171 = vsel %vm130, %v1003, 0.0
    %1172 = vadd.xlane.f32.xlu0 %v1171
    %v1173 = vpop.xlane.xlu0 %1172
    %v1174 = vsel %vm130, %v1004, 0.0
    %1175 = vadd.xlane.f32.xlu0 %v1174
    %v1176 = vpop.xlane.xlu0 %1175
    %v1177 = vsel %vm130, %v1005, 0.0
    %1178 = vadd.xlane.f32.xlu0 %v1177
    %v1179 = vpop.xlane.xlu0 %1178
    %v1180 = vsel %vm130, %v1006, 0.0
    %1181 = vadd.xlane.f32.xlu0 %v1180
    %v1182 = vpop.xlane.xlu0 %1181
    %v1183 = vsel %vm130, %v1007, 0.0
    %1184 = vadd.xlane.f32.xlu0 %v1183
    %v1185 = vpop.xlane.xlu0 %1184
    %v1186 = vsel %vm130, %v1008, 0.0
    %1187 = vadd.xlane.f32.xlu0 %v1186
    %v1188 = vpop.xlane.xlu0 %1187
    %v1189 = vsel %vm130, %v1009, 0.0
    %1190 = vadd.xlane.f32.xlu0 %v1189
    %v1191 = vpop.xlane.xlu0 %1190
    %v1192 = vsel %vm130, %v1010, 0.0
    %1193 = vadd.xlane.f32.xlu0 %v1192
    %v1194 = vpop.xlane.xlu0 %1193
    %v1195 = vsel %vm130, %v1011, 0.0
    %1196 = vadd.xlane.f32.xlu0 %v1195
    %v1197 = vpop.xlane.xlu0 %1196
    %v1198 = vsel %vm130, %v1012, 0.0
    %1199 = vadd.xlane.f32.xlu0 %v1198
    %v1200 = vpop.xlane.xlu0 %1199
    %v1201 = vsel %vm130, %v1013, 0.0
    %1202 = vadd.xlane.f32.xlu0 %v1201
    %v1203 = vpop.xlane.xlu0 %1202
    %v1204 = vsel %vm130, %v1014, 0.0
    %1205 = vadd.xlane.f32.xlu0 %v1204
    %v1206 = vpop.xlane.xlu0 %1205
    %v1207 = vmul.f32 %v887, %v887
    %v1208 = vmul.f32 %v888, %v888
    %v1209 = vmul.f32 %v889, %v889
    %v1210 = vmul.f32 %v890, %v890
    %v1211 = vmul.f32 %v891, %v891
    %v1212 = vmul.f32 %v892, %v892
    %v1213 = vmul.f32 %v893, %v893
    %v1214 = vmul.f32 %v894, %v894
    %v1215 = vmul.f32 %v895, %v895
    %v1216 = vmul.f32 %v896, %v896
    %v1217 = vmul.f32 %v897, %v897
    %v1218 = vmul.f32 %v898, %v898
    %v1219 = vmul.f32 %v899, %v899
    %v1220 = vmul.f32 %v900, %v900
    %v1221 = vmul.f32 %v901, %v901
    %v1222 = vmul.f32 %v902, %v902
    %v1223 = vmul.f32 %v903, %v903
    %v1224 = vmul.f32 %v904, %v904
    %v1225 = vmul.f32 %v905, %v905
    %v1226 = vmul.f32 %v906, %v906
    %v1227 = vmul.f32 %v907, %v907
    %v1228 = vmul.f32 %v908, %v908
    %v1229 = vmul.f32 %v909, %v909
    %v1230 = vmul.f32 %v910, %v910
    %v1231 = vmul.f32 %v911, %v911
    %v1232 = vmul.f32 %v912, %v912
    %v1233 = vmul.f32 %v913, %v913
    %v1234 = vmul.f32 %v914, %v914
    %v1235 = vmul.f32 %v915, %v915
    %v1236 = vmul.f32 %v916, %v916
    %v1237 = vmul.f32 %v917, %v917
    %v1238 = vmul.f32 %v918, %v918
    %v1239 = vmul.f32 %v919, %v919
    %v1240 = vmul.f32 %v920, %v920
    %v1241 = vmul.f32 %v921, %v921
    %v1242 = vmul.f32 %v922, %v922
    %v1243 = vmul.f32 %v923, %v923
    %v1244 = vmul.f32 %v924, %v924
    %v1245 = vmul.f32 %v925, %v925
    %v1246 = vmul.f32 %v926, %v926
    %v1247 = vmul.f32 %v927, %v927
    %v1248 = vmul.f32 %v928, %v928
    %v1249 = vmul.f32 %v929, %v929
    %v1250 = vmul.f32 %v930, %v930
    %v1251 = vmul.f32 %v931, %v931
    %v1252 = vmul.f32 %v932, %v932
    %v1253 = vmul.f32 %v933, %v933
    %v1254 = vmul.f32 %v934, %v934
    %v1255 = vmul.f32 %v935, %v935
    %v1256 = vmul.f32 %v936, %v936
    %v1257 = vmul.f32 %v937, %v937
    %v1258 = vmul.f32 %v938, %v938
    %v1259 = vmul.f32 %v939, %v939
    %v1260 = vmul.f32 %v940, %v940
    %v1261 = vmul.f32 %v941, %v941
    %v1262 = vmul.f32 %v942, %v942
    %v1263 = vmul.f32 %v943, %v943
    %v1264 = vmul.f32 %v944, %v944
    %v1265 = vmul.f32 %v945, %v945
    %v1266 = vmul.f32 %v946, %v946
    %v1267 = vmul.f32 %v947, %v947
    %v1268 = vmul.f32 %v948, %v948
    %v1269 = vmul.f32 %v949, %v949
    %v1270 = vmul.f32 %v950, %v950
    %v1271 = vsel %vm130, %v1207, 0.0
    %1272 = vadd.xlane.f32.xlu0 %v1271
    %v1273 = vpop.xlane.xlu0 %1272
    %v1274 = vsel %vm130, %v1208, 0.0
    %1275 = vadd.xlane.f32.xlu0 %v1274
    %v1276 = vpop.xlane.xlu0 %1275
    %v1277 = vsel %vm130, %v1209, 0.0
    %1278 = vadd.xlane.f32.xlu0 %v1277
    %v1279 = vpop.xlane.xlu0 %1278
    %v1280 = vsel %vm130, %v1210, 0.0
    %1281 = vadd.xlane.f32.xlu0 %v1280
    %v1282 = vpop.xlane.xlu0 %1281
    %v1283 = vsel %vm130, %v1211, 0.0
    %1284 = vadd.xlane.f32.xlu0 %v1283
    %v1285 = vpop.xlane.xlu0 %1284
    %v1286 = vsel %vm130, %v1212, 0.0
    %1287 = vadd.xlane.f32.xlu0 %v1286
    %v1288 = vpop.xlane.xlu0 %1287
    %v1289 = vsel %vm130, %v1213, 0.0
    %1290 = vadd.xlane.f32.xlu0 %v1289
    %v1291 = vpop.xlane.xlu0 %1290
    %v1292 = vsel %vm130, %v1214, 0.0
    %1293 = vadd.xlane.f32.xlu0 %v1292
    %v1294 = vpop.xlane.xlu0 %1293
    %v1295 = vsel %vm130, %v1215, 0.0
    %1296 = vadd.xlane.f32.xlu0 %v1295
    %v1297 = vpop.xlane.xlu0 %1296
    %v1298 = vsel %vm130, %v1216, 0.0
    %1299 = vadd.xlane.f32.xlu0 %v1298
    %v1300 = vpop.xlane.xlu0 %1299
    %v1301 = vsel %vm130, %v1217, 0.0
    %1302 = vadd.xlane.f32.xlu0 %v1301
    %v1303 = vpop.xlane.xlu0 %1302
    %v1304 = vsel %vm130, %v1218, 0.0
    %1305 = vadd.xlane.f32.xlu0 %v1304
    %v1306 = vpop.xlane.xlu0 %1305
    %v1307 = vsel %vm130, %v1219, 0.0
    %1308 = vadd.xlane.f32.xlu0 %v1307
    %v1309 = vpop.xlane.xlu0 %1308
    %v1310 = vsel %vm130, %v1220, 0.0
    %1311 = vadd.xlane.f32.xlu0 %v1310
    %v1312 = vpop.xlane.xlu0 %1311
    %v1313 = vsel %vm130, %v1221, 0.0
    %1314 = vadd.xlane.f32.xlu0 %v1313
    %v1315 = vpop.xlane.xlu0 %1314
    %v1316 = vsel %vm130, %v1222, 0.0
    %1317 = vadd.xlane.f32.xlu0 %v1316
    %v1318 = vpop.xlane.xlu0 %1317
    %v1319 = vsel %vm130, %v1223, 0.0
    %1320 = vadd.xlane.f32.xlu0 %v1319
    %v1321 = vpop.xlane.xlu0 %1320
    %v1322 = vsel %vm130, %v1224, 0.0
    %1323 = vadd.xlane.f32.xlu0 %v1322
    %v1324 = vpop.xlane.xlu0 %1323
    %v1325 = vsel %vm130, %v1225, 0.0
    %1326 = vadd.xlane.f32.xlu0 %v1325
    %v1327 = vpop.xlane.xlu0 %1326
    %v1328 = vsel %vm130, %v1226, 0.0
    %1329 = vadd.xlane.f32.xlu0 %v1328
    %v1330 = vpop.xlane.xlu0 %1329
    %v1331 = vsel %vm130, %v1227, 0.0
    %1332 = vadd.xlane.f32.xlu0 %v1331
    %v1333 = vpop.xlane.xlu0 %1332
    %v1334 = vsel %vm130, %v1228, 0.0
    %1335 = vadd.xlane.f32.xlu0 %v1334
    %v1336 = vpop.xlane.xlu0 %1335
    %v1337 = vsel %vm130, %v1229, 0.0
    %1338 = vadd.xlane.f32.xlu0 %v1337
    %v1339 = vpop.xlane.xlu0 %1338
    %v1340 = vsel %vm130, %v1230, 0.0
    %1341 = vadd.xlane.f32.xlu0 %v1340
    %v1342 = vpop.xlane.xlu0 %1341
    %v1343 = vsel %vm130, %v1231, 0.0
    %1344 = vadd.xlane.f32.xlu0 %v1343
    %v1345 = vpop.xlane.xlu0 %1344
    %v1346 = vsel %vm130, %v1232, 0.0
    %1347 = vadd.xlane.f32.xlu0 %v1346
    %v1348 = vpop.xlane.xlu0 %1347
    %v1349 = vsel %vm130, %v1233, 0.0
    %1350 = vadd.xlane.f32.xlu0 %v1349
    %v1351 = vpop.xlane.xlu0 %1350
    %v1352 = vsel %vm130, %v1234, 0.0
    %1353 = vadd.xlane.f32.xlu0 %v1352
    %v1354 = vpop.xlane.xlu0 %1353
    %v1355 = vsel %vm130, %v1235, 0.0
    %1356 = vadd.xlane.f32.xlu0 %v1355
    %v1357 = vpop.xlane.xlu0 %1356
    %v1358 = vsel %vm130, %v1236, 0.0
    %1359 = vadd.xlane.f32.xlu0 %v1358
    %v1360 = vpop.xlane.xlu0 %1359
    %v1361 = vsel %vm130, %v1237, 0.0
    %1362 = vadd.xlane.f32.xlu0 %v1361
    %v1363 = vpop.xlane.xlu0 %1362
    %v1364 = vsel %vm130, %v1238, 0.0
    %1365 = vadd.xlane.f32.xlu0 %v1364
    %v1366 = vpop.xlane.xlu0 %1365
    %v1367 = vsel %vm130, %v1239, 0.0
    %1368 = vadd.xlane.f32.xlu0 %v1367
    %v1369 = vpop.xlane.xlu0 %1368
    %v1370 = vsel %vm130, %v1240, 0.0
    %1371 = vadd.xlane.f32.xlu0 %v1370
    %v1372 = vpop.xlane.xlu0 %1371
    %v1373 = vsel %vm130, %v1241, 0.0
    %1374 = vadd.xlane.f32.xlu0 %v1373
    %v1375 = vpop.xlane.xlu0 %1374
    %v1376 = vsel %vm130, %v1242, 0.0
    %1377 = vadd.xlane.f32.xlu0 %v1376
    %v1378 = vpop.xlane.xlu0 %1377
    %v1379 = vsel %vm130, %v1243, 0.0
    %1380 = vadd.xlane.f32.xlu0 %v1379
    %v1381 = vpop.xlane.xlu0 %1380
    %v1382 = vsel %vm130, %v1244, 0.0
    %1383 = vadd.xlane.f32.xlu0 %v1382
    %v1384 = vpop.xlane.xlu0 %1383
    %v1385 = vsel %vm130, %v1245, 0.0
    %1386 = vadd.xlane.f32.xlu0 %v1385
    %v1387 = vpop.xlane.xlu0 %1386
    %v1388 = vsel %vm130, %v1246, 0.0
    %1389 = vadd.xlane.f32.xlu0 %v1388
    %v1390 = vpop.xlane.xlu0 %1389
    %v1391 = vsel %vm130, %v1247, 0.0
    %1392 = vadd.xlane.f32.xlu0 %v1391
    %v1393 = vpop.xlane.xlu0 %1392
    %v1394 = vsel %vm130, %v1248, 0.0
    %1395 = vadd.xlane.f32.xlu0 %v1394
    %v1396 = vpop.xlane.xlu0 %1395
    %v1397 = vsel %vm130, %v1249, 0.0
    %1398 = vadd.xlane.f32.xlu0 %v1397
    %v1399 = vpop.xlane.xlu0 %1398
    %v1400 = vsel %vm130, %v1250, 0.0
    %1401 = vadd.xlane.f32.xlu0 %v1400
    %v1402 = vpop.xlane.xlu0 %1401
    %v1403 = vsel %vm130, %v1251, 0.0
    %1404 = vadd.xlane.f32.xlu0 %v1403
    %v1405 = vpop.xlane.xlu0 %1404
    %v1406 = vsel %vm130, %v1252, 0.0
    %1407 = vadd.xlane.f32.xlu0 %v1406
    %v1408 = vpop.xlane.xlu0 %1407
    %v1409 = vsel %vm130, %v1253, 0.0
    %1410 = vadd.xlane.f32.xlu0 %v1409
    %v1411 = vpop.xlane.xlu0 %1410
    %v1412 = vsel %vm130, %v1254, 0.0
    %1413 = vadd.xlane.f32.xlu0 %v1412
    %v1414 = vpop.xlane.xlu0 %1413
    %v1415 = vsel %vm130, %v1255, 0.0
    %1416 = vadd.xlane.f32.xlu0 %v1415
    %v1417 = vpop.xlane.xlu0 %1416
    %v1418 = vsel %vm130, %v1256, 0.0
    %1419 = vadd.xlane.f32.xlu0 %v1418
    %v1420 = vpop.xlane.xlu0 %1419
    %v1421 = vsel %vm130, %v1257, 0.0
    %1422 = vadd.xlane.f32.xlu0 %v1421
    %v1423 = vpop.xlane.xlu0 %1422
    %v1424 = vsel %vm130, %v1258, 0.0
    %1425 = vadd.xlane.f32.xlu0 %v1424
    %v1426 = vpop.xlane.xlu0 %1425
    %v1427 = vsel %vm130, %v1259, 0.0
    %1428 = vadd.xlane.f32.xlu0 %v1427
    %v1429 = vpop.xlane.xlu0 %1428
    %v1430 = vsel %vm130, %v1260, 0.0
    %1431 = vadd.xlane.f32.xlu0 %v1430
    %v1432 = vpop.xlane.xlu0 %1431
    %v1433 = vsel %vm130, %v1261, 0.0
    %1434 = vadd.xlane.f32.xlu0 %v1433
    %v1435 = vpop.xlane.xlu0 %1434
    %v1436 = vsel %vm130, %v1262, 0.0
    %1437 = vadd.xlane.f32.xlu0 %v1436
    %v1438 = vpop.xlane.xlu0 %1437
    %v1439 = vsel %vm130, %v1263, 0.0
    %1440 = vadd.xlane.f32.xlu0 %v1439
    %v1441 = vpop.xlane.xlu0 %1440
    %v1442 = vsel %vm130, %v1264, 0.0
    %1443 = vadd.xlane.f32.xlu0 %v1442
    %v1444 = vpop.xlane.xlu0 %1443
    %v1445 = vsel %vm130, %v1265, 0.0
    %1446 = vadd.xlane.f32.xlu0 %v1445
    %v1447 = vpop.xlane.xlu0 %1446
    %v1448 = vsel %vm130, %v1266, 0.0
    %1449 = vadd.xlane.f32.xlu0 %v1448
    %v1450 = vpop.xlane.xlu0 %1449
    %v1451 = vsel %vm130, %v1267, 0.0
    %1452 = vadd.xlane.f32.xlu0 %v1451
    %v1453 = vpop.xlane.xlu0 %1452
    %v1454 = vsel %vm130, %v1268, 0.0
    %1455 = vadd.xlane.f32.xlu0 %v1454
    %v1456 = vpop.xlane.xlu0 %1455
    %v1457 = vsel %vm130, %v1269, 0.0
    %1458 = vadd.xlane.f32.xlu0 %v1457
    %v1459 = vpop.xlane.xlu0 %1458
    %v1460 = vsel %vm130, %v1270, 0.0
    %1461 = vadd.xlane.f32.xlu0 %v1460
    %v1462 = vpop.xlane.xlu0 %1461
    %v1463 = vmul.f32 %v1273, 2.0
    %v1464 = vmul.f32 %v1276, 2.0
    %v1465 = vmul.f32 %v1279, 2.0
    %v1466 = vmul.f32 %v1282, 2.0
    %v1467 = vmul.f32 %v1285, 2.0
    %v1468 = vmul.f32 %v1288, 2.0
    %v1469 = vmul.f32 %v1291, 2.0
    %v1470 = vmul.f32 %v1294, 2.0
    %v1471 = vmul.f32 %v1297, 2.0
    %v1472 = vmul.f32 %v1300, 2.0
    %v1473 = vmul.f32 %v1303, 2.0
    %v1474 = vmul.f32 %v1306, 2.0
    %v1475 = vmul.f32 %v1309, 2.0
    %v1476 = vmul.f32 %v1312, 2.0
    %v1477 = vmul.f32 %v1315, 2.0
    %v1478 = vmul.f32 %v1318, 2.0
    %v1479 = vmul.f32 %v1321, 2.0
    %v1480 = vmul.f32 %v1324, 2.0
    %v1481 = vmul.f32 %v1327, 2.0
    %v1482 = vmul.f32 %v1330, 2.0
    %v1483 = vmul.f32 %v1333, 2.0
    %v1484 = vmul.f32 %v1336, 2.0
    %v1485 = vmul.f32 %v1339, 2.0
    %v1486 = vmul.f32 %v1342, 2.0
    %v1487 = vmul.f32 %v1345, 2.0
    %v1488 = vmul.f32 %v1348, 2.0
    %v1489 = vmul.f32 %v1351, 2.0
    %v1490 = vmul.f32 %v1354, 2.0
    %v1491 = vmul.f32 %v1357, 2.0
    %v1492 = vmul.f32 %v1360, 2.0
    %v1493 = vmul.f32 %v1363, 2.0
    %v1494 = vmul.f32 %v1366, 2.0
    %v1495 = vmul.f32 %v1369, 2.0
    %v1496 = vmul.f32 %v1372, 2.0
    %v1497 = vmul.f32 %v1375, 2.0
    %v1498 = vmul.f32 %v1378, 2.0
    %v1499 = vmul.f32 %v1381, 2.0
    %v1500 = vmul.f32 %v1384, 2.0
    %v1501 = vmul.f32 %v1387, 2.0
    %v1502 = vmul.f32 %v1390, 2.0
    %v1503 = vmul.f32 %v1393, 2.0
    %v1504 = vmul.f32 %v1396, 2.0
    %v1505 = vmul.f32 %v1399, 2.0
    %v1506 = vmul.f32 %v1402, 2.0
    %v1507 = vmul.f32 %v1405, 2.0
    %v1508 = vmul.f32 %v1408, 2.0
    %v1509 = vmul.f32 %v1411, 2.0
    %v1510 = vmul.f32 %v1414, 2.0
    %v1511 = vmul.f32 %v1417, 2.0
    %v1512 = vmul.f32 %v1420, 2.0
    %v1513 = vmul.f32 %v1423, 2.0
    %v1514 = vmul.f32 %v1426, 2.0
    %v1515 = vmul.f32 %v1429, 2.0
    %v1516 = vmul.f32 %v1432, 2.0
    %v1517 = vmul.f32 %v1435, 2.0
    %v1518 = vmul.f32 %v1438, 2.0
    %v1519 = vmul.f32 %v1441, 2.0
    %v1520 = vmul.f32 %v1444, 2.0
    %v1521 = vmul.f32 %v1447, 2.0
    %v1522 = vmul.f32 %v1450, 2.0
    %v1523 = vmul.f32 %v1453, 2.0
    %v1524 = vmul.f32 %v1456, 2.0
    %v1525 = vmul.f32 %v1459, 2.0
    %v1526 = vmul.f32 %v1462, 2.0
    %v1527 = vsub.f32 %v1017, %v1463
    %v1528 = vsub.f32 %v1020, %v1464
    %v1529 = vsub.f32 %v1023, %v1465
    %v1530 = vsub.f32 %v1026, %v1466
    %v1531 = vsub.f32 %v1029, %v1467
    %v1532 = vsub.f32 %v1032, %v1468
    %v1533 = vsub.f32 %v1035, %v1469
    %v1534 = vsub.f32 %v1038, %v1470
    %v1535 = vsub.f32 %v1041, %v1471
    %v1536 = vsub.f32 %v1044, %v1472
    %v1537 = vsub.f32 %v1047, %v1473
    %v1538 = vsub.f32 %v1050, %v1474
    %v1539 = vsub.f32 %v1053, %v1475
    %v1540 = vsub.f32 %v1056, %v1476
    %v1541 = vsub.f32 %v1059, %v1477
    %v1542 = vsub.f32 %v1062, %v1478
    %v1543 = vsub.f32 %v1065, %v1479
    %v1544 = vsub.f32 %v1068, %v1480
    %v1545 = vsub.f32 %v1071, %v1481
    %v1546 = vsub.f32 %v1074, %v1482
    %v1547 = vsub.f32 %v1077, %v1483
    %v1548 = vsub.f32 %v1080, %v1484
    %v1549 = vsub.f32 %v1083, %v1485
    %v1550 = vsub.f32 %v1086, %v1486
    %v1551 = vsub.f32 %v1089, %v1487
    %v1552 = vsub.f32 %v1092, %v1488
    %v1553 = vsub.f32 %v1095, %v1489
    %v1554 = vsub.f32 %v1098, %v1490
    %v1555 = vsub.f32 %v1101, %v1491
    %v1556 = vsub.f32 %v1104, %v1492
    %v1557 = vsub.f32 %v1107, %v1493
    %v1558 = vsub.f32 %v1110, %v1494
    %v1559 = vsub.f32 %v1113, %v1495
    %v1560 = vsub.f32 %v1116, %v1496
    %v1561 = vsub.f32 %v1119, %v1497
    %v1562 = vsub.f32 %v1122, %v1498
    %v1563 = vsub.f32 %v1125, %v1499
    %v1564 = vsub.f32 %v1128, %v1500
    %v1565 = vsub.f32 %v1131, %v1501
    %v1566 = vsub.f32 %v1134, %v1502
    %v1567 = vsub.f32 %v1137, %v1503
    %v1568 = vsub.f32 %v1140, %v1504
    %v1569 = vsub.f32 %v1143, %v1505
    %v1570 = vsub.f32 %v1146, %v1506
    %v1571 = vsub.f32 %v1149, %v1507
    %v1572 = vsub.f32 %v1152, %v1508
    %v1573 = vsub.f32 %v1155, %v1509
    %v1574 = vsub.f32 %v1158, %v1510
    %v1575 = vsub.f32 %v1161, %v1511
    %v1576 = vsub.f32 %v1164, %v1512
    %v1577 = vsub.f32 %v1167, %v1513
    %v1578 = vsub.f32 %v1170, %v1514
    %v1579 = vsub.f32 %v1173, %v1515
    %v1580 = vsub.f32 %v1176, %v1516
    %v1581 = vsub.f32 %v1179, %v1517
    %v1582 = vsub.f32 %v1182, %v1518
    %v1583 = vsub.f32 %v1185, %v1519
    %v1584 = vsub.f32 %v1188, %v1520
    %v1585 = vsub.f32 %v1191, %v1521
    %v1586 = vsub.f32 %v1194, %v1522
    %v1587 = vsub.f32 %v1197, %v1523
    %v1588 = vsub.f32 %v1200, %v1524
    %v1589 = vsub.f32 %v1203, %v1525
    %v1590 = vsub.f32 %v1206, %v1526
    %v1655 = vlaneseq
    %v1656 = vshrl.u32 %v1655, 7
    %v1657 = vsub.s32 %v105, %v1656
    %v1658 = vrot.slane %v1527, %v1657
    %v1659 = vadd.s32 %v105, 4294967288
    %v1660 = vlaneseq
    %v1661 = vshrl.u32 %v1660, 7
    %v1662 = vsub.s32 %v1659, %v1661
    %v1663 = vrot.slane %v1528, %v1662
    %vm1664 = vcmask 130112
    %v1665 = vsel %vm1664, %v1663, %v1658
    %v1666 = vadd.s32 %v105, 4294967280
    %v1667 = vlaneseq
    %v1668 = vshrl.u32 %v1667, 7
    %v1669 = vsub.s32 %v1666, %v1668
    %v1670 = vrot.slane %v1529, %v1669
    %vm1671 = vcmask 195712
    %v1672 = vsel %vm1671, %v1670, %v1665
    %v1673 = vadd.s32 %v105, 4294967272
    %v1674 = vlaneseq
    %v1675 = vshrl.u32 %v1674, 7
    %v1676 = vsub.s32 %v1673, %v1675
    %v1677 = vrot.slane %v1530, %v1676
    %vm1678 = vcmask 261312
    %v1679 = vsel %vm1678, %v1677, %v1672
    %v1680 = vadd.s32 %v105, 4294967264
    %v1681 = vlaneseq
    %v1682 = vshrl.u32 %v1681, 7
    %v1683 = vsub.s32 %v1680, %v1682
    %v1684 = vrot.slane %v1531, %v1683
    %vm1685 = vcmask 326912
    %v1686 = vsel %vm1685, %v1684, %v1679
    %v1687 = vadd.s32 %v105, 4294967256
    %v1688 = vlaneseq
    %v1689 = vshrl.u32 %v1688, 7
    %v1690 = vsub.s32 %v1687, %v1689
    %v1691 = vrot.slane %v1532, %v1690
    %vm1692 = vcmask 392512
    %v1693 = vsel %vm1692, %v1691, %v1686
    %v1694 = vadd.s32 %v105, 4294967248
    %v1695 = vlaneseq
    %v1696 = vshrl.u32 %v1695, 7
    %v1697 = vsub.s32 %v1694, %v1696
    %v1698 = vrot.slane %v1533, %v1697
    %vm1699 = vcmask 458112
    %v1700 = vsel %vm1699, %v1698, %v1693
    %v1701 = vadd.s32 %v105, 4294967240
    %v1702 = vlaneseq
    %v1703 = vshrl.u32 %v1702, 7
    %v1704 = vsub.s32 %v1701, %v1703
    %v1705 = vrot.slane %v1534, %v1704
    %vm1706 = vcmask 523712
    %v1707 = vsel %vm1706, %v1705, %v1700
    %v1708 = vlaneseq
    %v1709 = vshrl.u32 %v1708, 7
    %v1710 = vsub.s32 %v105, %v1709
    %v1711 = vrot.slane %v1535, %v1710
    %v1712 = vlaneseq
    %v1713 = vshrl.u32 %v1712, 7
    %v1714 = vsub.s32 %v1659, %v1713
    %v1715 = vrot.slane %v1536, %v1714
    %v1716 = vsel %vm1664, %v1715, %v1711
    %v1717 = vlaneseq
    %v1718 = vshrl.u32 %v1717, 7
    %v1719 = vsub.s32 %v1666, %v1718
    %v1720 = vrot.slane %v1537, %v1719
    %v1721 = vsel %vm1671, %v1720, %v1716
    %v1722 = vlaneseq
    %v1723 = vshrl.u32 %v1722, 7
    %v1724 = vsub.s32 %v1673, %v1723
    %v1725 = vrot.slane %v1538, %v1724
    %v1726 = vsel %vm1678, %v1725, %v1721
    %v1727 = vlaneseq
    %v1728 = vshrl.u32 %v1727, 7
    %v1729 = vsub.s32 %v1680, %v1728
    %v1730 = vrot.slane %v1539, %v1729
    %v1731 = vsel %vm1685, %v1730, %v1726
    %v1732 = vlaneseq
    %v1733 = vshrl.u32 %v1732, 7
    %v1734 = vsub.s32 %v1687, %v1733
    %v1735 = vrot.slane %v1540, %v1734
    %v1736 = vsel %vm1692, %v1735, %v1731
    %v1737 = vlaneseq
    %v1738 = vshrl.u32 %v1737, 7
    %v1739 = vsub.s32 %v1694, %v1738
    %v1740 = vrot.slane %v1541, %v1739
    %v1741 = vsel %vm1699, %v1740, %v1736
    %v1742 = vlaneseq
    %v1743 = vshrl.u32 %v1742, 7
    %v1744 = vsub.s32 %v1701, %v1743
    %v1745 = vrot.slane %v1542, %v1744
    %v1746 = vsel %vm1706, %v1745, %v1741
    %v1747 = vlaneseq
    %v1748 = vshrl.u32 %v1747, 7
    %v1749 = vsub.s32 %v105, %v1748
    %v1750 = vrot.slane %v1543, %v1749
    %v1751 = vlaneseq
    %v1752 = vshrl.u32 %v1751, 7
    %v1753 = vsub.s32 %v1659, %v1752
    %v1754 = vrot.slane %v1544, %v1753
    %v1755 = vsel %vm1664, %v1754, %v1750
    %v1756 = vlaneseq
    %v1757 = vshrl.u32 %v1756, 7
    %v1758 = vsub.s32 %v1666, %v1757
    %v1759 = vrot.slane %v1545, %v1758
    %v1760 = vsel %vm1671, %v1759, %v1755
    %v1761 = vlaneseq
    %v1762 = vshrl.u32 %v1761, 7
    %v1763 = vsub.s32 %v1673, %v1762
    %v1764 = vrot.slane %v1546, %v1763
    %v1765 = vsel %vm1678, %v1764, %v1760
    %v1766 = vlaneseq
    %v1767 = vshrl.u32 %v1766, 7
    %v1768 = vsub.s32 %v1680, %v1767
    %v1769 = vrot.slane %v1547, %v1768
    %v1770 = vsel %vm1685, %v1769, %v1765
    %v1771 = vlaneseq
    %v1772 = vshrl.u32 %v1771, 7
    %v1773 = vsub.s32 %v1687, %v1772
    %v1774 = vrot.slane %v1548, %v1773
    %v1775 = vsel %vm1692, %v1774, %v1770
    %v1776 = vlaneseq
    %v1777 = vshrl.u32 %v1776, 7
    %v1778 = vsub.s32 %v1694, %v1777
    %v1779 = vrot.slane %v1549, %v1778
    %v1780 = vsel %vm1699, %v1779, %v1775
    %v1781 = vlaneseq
    %v1782 = vshrl.u32 %v1781, 7
    %v1783 = vsub.s32 %v1701, %v1782
    %v1784 = vrot.slane %v1550, %v1783
    %v1785 = vsel %vm1706, %v1784, %v1780
    %v1786 = vlaneseq
    %v1787 = vshrl.u32 %v1786, 7
    %v1788 = vsub.s32 %v105, %v1787
    %v1789 = vrot.slane %v1551, %v1788
    %v1790 = vlaneseq
    %v1791 = vshrl.u32 %v1790, 7
    %v1792 = vsub.s32 %v1659, %v1791
    %v1793 = vrot.slane %v1552, %v1792
    %v1794 = vsel %vm1664, %v1793, %v1789
    %v1795 = vlaneseq
    %v1796 = vshrl.u32 %v1795, 7
    %v1797 = vsub.s32 %v1666, %v1796
    %v1798 = vrot.slane %v1553, %v1797
    %v1799 = vsel %vm1671, %v1798, %v1794
    %v1800 = vlaneseq
    %v1801 = vshrl.u32 %v1800, 7
    %v1802 = vsub.s32 %v1673, %v1801
    %v1803 = vrot.slane %v1554, %v1802
    %v1804 = vsel %vm1678, %v1803, %v1799
    %v1805 = vlaneseq
    %v1806 = vshrl.u32 %v1805, 7
    %v1807 = vsub.s32 %v1680, %v1806
    %v1808 = vrot.slane %v1555, %v1807
    %v1809 = vsel %vm1685, %v1808, %v1804
    %v1810 = vlaneseq
    %v1811 = vshrl.u32 %v1810, 7
    %v1812 = vsub.s32 %v1687, %v1811
    %v1813 = vrot.slane %v1556, %v1812
    %v1814 = vsel %vm1692, %v1813, %v1809
    %v1815 = vlaneseq
    %v1816 = vshrl.u32 %v1815, 7
    %v1817 = vsub.s32 %v1694, %v1816
    %v1818 = vrot.slane %v1557, %v1817
    %v1819 = vsel %vm1699, %v1818, %v1814
    %v1820 = vlaneseq
    %v1821 = vshrl.u32 %v1820, 7
    %v1822 = vsub.s32 %v1701, %v1821
    %v1823 = vrot.slane %v1558, %v1822
    %v1824 = vsel %vm1706, %v1823, %v1819
    %v1825 = vlaneseq
    %v1826 = vshrl.u32 %v1825, 7
    %v1827 = vsub.s32 %v105, %v1826
    %v1828 = vrot.slane %v1559, %v1827
    %v1829 = vlaneseq
    %v1830 = vshrl.u32 %v1829, 7
    %v1831 = vsub.s32 %v1659, %v1830
    %v1832 = vrot.slane %v1560, %v1831
    %v1833 = vsel %vm1664, %v1832, %v1828
    %v1834 = vlaneseq
    %v1835 = vshrl.u32 %v1834, 7
    %v1836 = vsub.s32 %v1666, %v1835
    %v1837 = vrot.slane %v1561, %v1836
    %v1838 = vsel %vm1671, %v1837, %v1833
    %v1839 = vlaneseq
    %v1840 = vshrl.u32 %v1839, 7
    %v1841 = vsub.s32 %v1673, %v1840
    %v1842 = vrot.slane %v1562, %v1841
    %v1843 = vsel %vm1678, %v1842, %v1838
    %v1844 = vlaneseq
    %v1845 = vshrl.u32 %v1844, 7
    %v1846 = vsub.s32 %v1680, %v1845
    %v1847 = vrot.slane %v1563, %v1846
    %v1848 = vsel %vm1685, %v1847, %v1843
    %v1849 = vlaneseq
    %v1850 = vshrl.u32 %v1849, 7
    %v1851 = vsub.s32 %v1687, %v1850
    %v1852 = vrot.slane %v1564, %v1851
    %v1853 = vsel %vm1692, %v1852, %v1848
    %v1854 = vlaneseq
    %v1855 = vshrl.u32 %v1854, 7
    %v1856 = vsub.s32 %v1694, %v1855
    %v1857 = vrot.slane %v1565, %v1856
    %v1858 = vsel %vm1699, %v1857, %v1853
    %v1859 = vlaneseq
    %v1860 = vshrl.u32 %v1859, 7
    %v1861 = vsub.s32 %v1701, %v1860
    %v1862 = vrot.slane %v1566, %v1861
    %v1863 = vsel %vm1706, %v1862, %v1858
    %v1864 = vlaneseq
    %v1865 = vshrl.u32 %v1864, 7
    %v1866 = vsub.s32 %v105, %v1865
    %v1867 = vrot.slane %v1567, %v1866
    %v1868 = vlaneseq
    %v1869 = vshrl.u32 %v1868, 7
    %v1870 = vsub.s32 %v1659, %v1869
    %v1871 = vrot.slane %v1568, %v1870
    %v1872 = vsel %vm1664, %v1871, %v1867
    %v1873 = vlaneseq
    %v1874 = vshrl.u32 %v1873, 7
    %v1875 = vsub.s32 %v1666, %v1874
    %v1876 = vrot.slane %v1569, %v1875
    %v1877 = vsel %vm1671, %v1876, %v1872
    %v1878 = vlaneseq
    %v1879 = vshrl.u32 %v1878, 7
    %v1880 = vsub.s32 %v1673, %v1879
    %v1881 = vrot.slane %v1570, %v1880
    %v1882 = vsel %vm1678, %v1881, %v1877
    %v1883 = vlaneseq
    %v1884 = vshrl.u32 %v1883, 7
    %v1885 = vsub.s32 %v1680, %v1884
    %v1886 = vrot.slane %v1571, %v1885
    %v1887 = vsel %vm1685, %v1886, %v1882
    %v1888 = vlaneseq
    %v1889 = vshrl.u32 %v1888, 7
    %v1890 = vsub.s32 %v1687, %v1889
    %v1891 = vrot.slane %v1572, %v1890
    %v1892 = vsel %vm1692, %v1891, %v1887
    %v1893 = vlaneseq
    %v1894 = vshrl.u32 %v1893, 7
    %v1895 = vsub.s32 %v1694, %v1894
    %v1896 = vrot.slane %v1573, %v1895
    %v1897 = vsel %vm1699, %v1896, %v1892
    %v1898 = vlaneseq
    %v1899 = vshrl.u32 %v1898, 7
    %v1900 = vsub.s32 %v1701, %v1899
    %v1901 = vrot.slane %v1574, %v1900
    %v1902 = vsel %vm1706, %v1901, %v1897
    %v1903 = vlaneseq
    %v1904 = vshrl.u32 %v1903, 7
    %v1905 = vsub.s32 %v105, %v1904
    %v1906 = vrot.slane %v1575, %v1905
    %v1907 = vlaneseq
    %v1908 = vshrl.u32 %v1907, 7
    %v1909 = vsub.s32 %v1659, %v1908
    %v1910 = vrot.slane %v1576, %v1909
    %v1911 = vsel %vm1664, %v1910, %v1906
    %v1912 = vlaneseq
    %v1913 = vshrl.u32 %v1912, 7
    %v1914 = vsub.s32 %v1666, %v1913
    %v1915 = vrot.slane %v1577, %v1914
    %v1916 = vsel %vm1671, %v1915, %v1911
    %v1917 = vlaneseq
    %v1918 = vshrl.u32 %v1917, 7
    %v1919 = vsub.s32 %v1673, %v1918
    %v1920 = vrot.slane %v1578, %v1919
    %v1921 = vsel %vm1678, %v1920, %v1916
    %v1922 = vlaneseq
    %v1923 = vshrl.u32 %v1922, 7
    %v1924 = vsub.s32 %v1680, %v1923
    %v1925 = vrot.slane %v1579, %v1924
    %v1926 = vsel %vm1685, %v1925, %v1921
    %v1927 = vlaneseq
    %v1928 = vshrl.u32 %v1927, 7
    %v1929 = vsub.s32 %v1687, %v1928
    %v1930 = vrot.slane %v1580, %v1929
    %v1931 = vsel %vm1692, %v1930, %v1926
    %v1932 = vlaneseq
    %v1933 = vshrl.u32 %v1932, 7
    %v1934 = vsub.s32 %v1694, %v1933
    %v1935 = vrot.slane %v1581, %v1934
    %v1936 = vsel %vm1699, %v1935, %v1931
    %v1937 = vlaneseq
    %v1938 = vshrl.u32 %v1937, 7
    %v1939 = vsub.s32 %v1701, %v1938
    %v1940 = vrot.slane %v1582, %v1939
    %v1941 = vsel %vm1706, %v1940, %v1936
    %v1942 = vlaneseq
    %v1943 = vshrl.u32 %v1942, 7
    %v1944 = vsub.s32 %v105, %v1943
    %v1945 = vrot.slane %v1583, %v1944
    %v1946 = vlaneseq
    %v1947 = vshrl.u32 %v1946, 7
    %v1948 = vsub.s32 %v1659, %v1947
    %v1949 = vrot.slane %v1584, %v1948
    %v1950 = vsel %vm1664, %v1949, %v1945
    %v1951 = vlaneseq
    %v1952 = vshrl.u32 %v1951, 7
    %v1953 = vsub.s32 %v1666, %v1952
    %v1954 = vrot.slane %v1585, %v1953
    %v1955 = vsel %vm1671, %v1954, %v1950
    %v1956 = vlaneseq
    %v1957 = vshrl.u32 %v1956, 7
    %v1958 = vsub.s32 %v1673, %v1957
    %v1959 = vrot.slane %v1586, %v1958
    %v1960 = vsel %vm1678, %v1959, %v1955
    %v1961 = vlaneseq
    %v1962 = vshrl.u32 %v1961, 7
    %v1963 = vsub.s32 %v1680, %v1962
    %v1964 = vrot.slane %v1587, %v1963
    %v1965 = vsel %vm1685, %v1964, %v1960
    %v1966 = vlaneseq
    %v1967 = vshrl.u32 %v1966, 7
    %v1968 = vsub.s32 %v1687, %v1967
    %v1969 = vrot.slane %v1588, %v1968
    %v1970 = vsel %vm1692, %v1969, %v1965
    %v1971 = vlaneseq
    %v1972 = vshrl.u32 %v1971, 7
    %v1973 = vsub.s32 %v1694, %v1972
    %v1974 = vrot.slane %v1589, %v1973
    %v1975 = vsel %vm1699, %v1974, %v1970
    %v1976 = vlaneseq
    %v1977 = vshrl.u32 %v1976, 7
    %v1978 = vsub.s32 %v1701, %v1977
    %v1979 = vrot.slane %v1590, %v1978
    %v1980 = vsel %vm1706, %v1979, %v1975
    %vm1981 = vcmask 1041409
    %v1982 = vsel %vm1981, %v1746, %v1707
    %vm1983 = vcmask 1042434
    %v1984 = vsel %vm1983, %v1785, %v1982
    %vm1985 = vcmask 1043459
    %v1986 = vsel %vm1985, %v1824, %v1984
    %vm1987 = vcmask 1044484
    %v1988 = vsel %vm1987, %v1863, %v1986
    %vm1989 = vcmask 1045509
    %v1990 = vsel %vm1989, %v1902, %v1988
    %vm1991 = vcmask 1046534
    %v1992 = vsel %vm1991, %v1941, %v1990
    %vm1993 = vcmask 1047559
    %v1994 = vsel %vm1993, %v1980, %v1992
    %v1996 = vsel %vm130, %v1994, 0.0
    %1997 = vadd.xlane.f32.xlu0 %v1996
    %v1998 = vpop.xlane.xlu0 %1997
    %v1999 = vadd.f32 %v1998, 64.0
    %v2000 = vmax.f32 %v1999, 0.0
    %v2001 = vrsqrt.pop %v2000
    %v2002 = vmul.f32 %v2000, %v2001
    %vm2003 = vcmp.eq.f32.partialorder %v2000, inf
    %v2004 = vsel %vm2003, %v2000, %v2002
    %vm2005 = vcmp.eq.f32.partialorder %v2000, 0.0
    %v2006 = vand.u32 %v2000, 2147483648
    %v2007 = vsel %vm2005, %v2006, %v2004
    %v2008 = vsel %vm109, %v38, 0.0
    %s2009 = sld [smem:[#allocation2]]
    %vm2010 = vcmask 130048
    %v2011 = vsel %vm2010, %v2008, 0.0
    %2012 = vadd.xlane.f32.xlu0 %v2011
    %v2013 = vpop.xlane.xlu0 %2012
    %v2014 = vrot.slane %v2013, 4
    %v2015 = vadd.f32 %v2013, %v2014
    %v2016 = vrot.slane %v2015, 2
    %v2017 = vadd.f32 %v2015, %v2016
    %v2018 = vrot.slane %v2017, 1
    %v2019 = vadd.f32 %v2017, %v2018
    %s2020 = vtos %v2019
    %s2021 = sadd.f32 %s2009, %s2020
    %s2022 = scalar_lea.smem [#allocation2], 0
    %2023 = sst [smem:[%s2022]] %s2021
    %s2024 = sld [smem:[#allocation2 + $0x1]]
    %vm2025 = vcmask 7168
    %v2026 = vsel %vm2025, %v2007, 0.0
    %2027 = vadd.xlane.f32.xlu0 %v2026
    %v2028 = vpop.xlane.xlu0 %2027
    %v2029 = vrot.slane %v2028, 4
    %v2030 = vadd.f32 %v2028, %v2029
    %v2031 = vrot.slane %v2030, 2
    %v2032 = vadd.f32 %v2030, %v2031
    %v2033 = vrot.slane %v2032, 1
    %v2034 = vadd.f32 %v2032, %v2033
    %s2035 = vtos %v2034
    %s2036 = sadd.f32 %s2024, %s2035
    %s2037 = scalar_lea.smem [#allocation2], 1
    %2038 = sst [smem:[%s2037]] %s2036
    // Predicated region
    $region22: #{tpu_custom_call.1} parent=1 // pred_check
      %p2039 = pneg %p30
    $region23: #{tpu_custom_call.1} parent=1 // pred_check_branch
      %2041 = sbr.rel (%p2039) target = $region25
    $region24: #{tpu_custom_call.1} parent=1 // pred_region
      %s2042 = sld [smem:[#allocation2]]
      %s2043 = smul.f32 %s2042, -0.125
      %s2044 = sld [smem:[#allocation2 + $0x1]]
      %s2045 = smul.f32 %s2044, 0.000125
      %s2046 = sadd.f32 %s2043, %s2045
      %s2047 = scalar_lea.smem [#allocation6], 0
      %2048 = sst [smem:[%s2047]] %s2046
    $region25: #{tpu_custom_call.1} parent=1 // pred_fallthru
      _
    // Predicated region
    $region26: #{tpu_custom_call.1} parent=1 // pred_check
      _
    $region27: #{tpu_custom_call.1} parent=1 // pred_check_branch
      %2050 = sbr.rel (0) target = $region29
    $region28: #{tpu_custom_call.1} parent=1 // pred_region
      %s2052 = ssub.s32 16, 16
      %2053 = vsyncadd [#allocation5], %s2052
      %2056 = dma.smem_to_hbm [#allocation6], 16, %s3, [#allocation5]
    $region29: #{tpu_custom_call.1} parent=1 // pred_fallthru
      _
    // Predicated region
    $region30: #{tpu_custom_call.1} parent=1 // pred_check
      _
    $region31: #{tpu_custom_call.1} parent=1 // pred_check_branch
      %2058 = sbr.rel (0) target = $region33
    $region32: #{tpu_custom_call.1} parent=1 // pred_region
      %2059 = dma.done [#allocation5], 16
    $region33: #{tpu_custom_call.1} parent=1 // pred_fallthru
      _
    %2060 = sfence
    %2061 = vsyncpa [#allocation4], 1
    %2062 = vsyncpa [#allocation5], 1

</llo_original>
